<compile_context>
chip_gen: v7x
topology: tpu7x:2x2x1
jax: 0.10.0
libtpu: 0.0.40
codegen_flags: <defaults>
</compile_context>

<pallas_src>
import functools

import jax
import jax.numpy as jnp
from jax import lax
from jax.experimental import pallas as pl
from jax.experimental.pallas import tpu as pltpu


def _round_up(n, m):
    return -(-n // m) * m


def _global_max_pool_kernel(x_ref, batch_ref, o_ref, *, tile_n, n_nodes,
                            num_graphs, fill_value):
    step = pl.program_id(0)

    # Init the resident accumulator on the first reduction step.
    @pl.when(step == 0)
    def _():
        o_ref[...] = jnp.full(o_ref.shape, fill_value, dtype=o_ref.dtype)

    x_t = x_ref[...]        # (tile_n, F)
    b_t = batch_ref[...]    # (tile_n, 1) int32 graph ids

    # Mask rows past the true node count (ragged last tile) -> graph id -1
    # never matches any real graph, so those rows contribute nothing.
    row = step * tile_n + lax.broadcasted_iota(jnp.int32, b_t.shape, 0)
    b_t = jnp.where(row < n_nodes, b_t, jnp.int32(-1))

    # num_graphs is small & static -> unrolled per-graph masked max.
    # TODO(synk): for large num_graphs, switch to scalar-prefetched per-graph
    # node offsets (sorted batch) instead of an unrolled mask loop.
    for g in range(num_graphs):
        m = b_t == g                                                # (tile_n, 1)
        contrib = jnp.max(jnp.where(m, x_t, fill_value),
                          axis=0, keepdims=True)                   # (1, F)
        o_ref[g:g + 1, :] = jnp.maximum(o_ref[g:g + 1, :], contrib)


def global_max_pool_pallas(x, batch, num_graphs):
    """Pallas TPU implementation of torch_geometric global_max_pool."""
    n_nodes, n_feat = x.shape
    dtype = x.dtype
    if jnp.issubdtype(dtype, jnp.floating):
        fill_value = -float("inf")
    else:
        fill_value = int(jnp.iinfo(dtype).min)

    # Row tile: multiple of 8, as large as reasonable (up to 512 rows or
    # ~4 MiB per block) so the DMA pipeline is not overhead-dominated while
    # in/out double buffers stay well under scoped VMEM on all generations.
    itemsize = jnp.dtype(dtype).itemsize
    max_rows_by_vmem = max(8, (((4 << 20) // max(1, n_feat * itemsize)) // 8) * 8)
    tile_n = min(_round_up(n_nodes, 8), 512, max_rows_by_vmem)

    grid = (pl.cdiv(n_nodes, tile_n),)

    batch2d = batch.astype(jnp.int32).reshape(n_nodes, 1)

    kernel = functools.partial(
        _global_max_pool_kernel,
        tile_n=tile_n,
        n_nodes=n_nodes,
        num_graphs=num_graphs,
        fill_value=fill_value,
    )

    out = pl.pallas_call(
        kernel,
        out_shape=jax.ShapeDtypeStruct((num_graphs, n_feat), dtype),
        grid_spec=pltpu.PrefetchScalarGridSpec(
            num_scalar_prefetch=0,
            grid=grid,
            in_specs=[
                pl.BlockSpec((tile_n, n_feat), lambda i: (i, 0)),
                pl.BlockSpec((tile_n, 1), lambda i: (i, 0)),
            ],
            # Same block index for every step -> VMEM-resident accumulator.
            out_specs=pl.BlockSpec((num_graphs, n_feat), lambda i: (0, 0)),
        ),
        compiler_params=pltpu.CompilerParams(
            # The single grid axis is a reduction axis (output block is
            # invariant across it), so it must be "arbitrary".
            dimension_semantics=("arbitrary",),
        ),
    )(x, batch2d)
    return out


if __name__ == "__main__":
    key = jax.random.PRNGKey(0)

    num_graphs = 3
    nodes_per_graph = (500, 400, 300)          # N = 1200 nodes, ragged graphs
    n_feat = 64
    n_nodes = sum(nodes_per_graph)

    x = jax.random.normal(key, (n_nodes, n_feat), dtype=jnp.float32)
    batch = jnp.concatenate([
        jnp.full((n,), g, dtype=jnp.int32)
        for g, n in enumerate(nodes_per_graph)
    ])

    y = global_max_pool_pallas(x, batch, num_graphs)
    jax.block_until_ready(y)

    # Pure-JAX reference (static shapes, masked max per graph).
    ref = jnp.stack([
        jnp.max(jnp.where((batch == g)[:, None], x, -jnp.inf), axis=0)
        for g in range(num_graphs)
    ])

    assert y.shape == (num_graphs, n_feat) and y.dtype == x.dtype
    assert bool(jnp.allclose(y, ref)), "mismatch vs reference segment max"
    print("KERNEL_OK")
</pallas_src>

<mosaic_0001>
module attributes {stable_mosaic.version = 11 : i64} {
  func.func @_global_max_pool_kernel(%arg0: i32, %arg1: memref<512x64xf32, #tpu.memory_space<vmem>>, %arg2: memref<512x1xi32, #tpu.memory_space<vmem>>, %arg3: memref<3x64xf32, #tpu.memory_space<vmem>>) attributes {dimension_semantics = [#tpu.dimension_semantics<arbitrary>], iteration_bounds = array<i64: 3>, scalar_prefetch = 0 : i64, scratch_operands = 0 : i64, tpu.core_type = #tpu.core_type<tc>, window_params = [{transform_indices = @transform_0, window_bounds = array<i64: 512, 64>}, {transform_indices = @transform_1, window_bounds = array<i64: 512, 1>}, {pipeline_mode = #tpu.pipeline_mode<synchronous>, transform_indices = @transform_2, window_bounds = array<i64: 3, 64>}]} {
    %c0_i32 = arith.constant 0 : i32
    %0 = arith.cmpi eq, %arg0, %c0_i32 : i32
    %1 = arith.extui %0 : i1 to i32
    %c0_i32_0 = arith.constant 0 : i32
    %2 = arith.cmpi ne, %1, %c0_i32_0 : i32
    scf.if %2 {
      %cst_20 = arith.constant 0xFF800000 : f32
      %46 = vector.broadcast %cst_20 : f32 to vector<3x64xf32>
      %c0_21 = arith.constant 0 : index
      %c0_22 = arith.constant 0 : index
      %47 = vector.load %arg3[%c0_21, %c0_22] : memref<3x64xf32, #tpu.memory_space<vmem>>, vector<3x64xf32>
      tpu.vector_store %arg3[%c0_21, %c0_22], %46 {strides = array<i32>} : memref<3x64xf32, #tpu.memory_space<vmem>>, vector<3x64xf32>,
    } else {
    }
    %c0 = arith.constant 0 : index
    %c0_1 = arith.constant 0 : index
    %3 = vector.load %arg1[%c0, %c0_1] : memref<512x64xf32, #tpu.memory_space<vmem>>, vector<512x64xf32>
    %c0_2 = arith.constant 0 : index
    %c0_3 = arith.constant 0 : index
    %4 = vector.load %arg2[%c0_2, %c0_3] : memref<512x1xi32, #tpu.memory_space<vmem>>, vector<512x1xi32>
    %c512_i32 = arith.constant 512 : i32
    %5 = arith.muli %arg0, %c512_i32 : i32
    %6 = tpu.iota {dimensions = array<i32: 0>} : vector<512x1xi32>
    %7 = vector.broadcast %5 : i32 to vector<512x1xi32>
    %8 = arith.addi %7, %6 : vector<512x1xi32>
    %c1200_i32 = arith.constant 1200 : i32
    %9 = vector.broadcast %c1200_i32 : i32 to vector<512x1xi32>
    %10 = arith.cmpi slt, %8, %9 : vector<512x1xi32>
    %c-1_i32 = arith.constant -1 : i32
    %11 = vector.broadcast %c-1_i32 : i32 to vector<512x1xi32>
    %12 = arith.select %10, %4, %11 : vector<512x1xi1>, vector<512x1xi32>
    %c0_i32_4 = arith.constant 0 : i32
    %13 = vector.broadcast %c0_i32_4 : i32 to vector<512x1xi32>
    %14 = arith.cmpi eq, %12, %13 : vector<512x1xi32>
    %cst = arith.constant 0xFF800000 : f32
    %15 = vector.shape_cast %14 : vector<512x1xi1> to vector<512x1xi1>
    %16 = vector.broadcast %15 : vector<512x1xi1> to vector<512x64xi1>
    %17 = vector.broadcast %cst : f32 to vector<512x64xf32>
    %18 = arith.select %16, %3, %17 : vector<512x64xi1>, vector<512x64xf32>
    %cst_5 = arith.constant dense<0xFF800000> : vector<64xf32>
    %19 = vector.multi_reduction <maximumf>, %18, %cst_5 [0] : vector<512x64xf32> to vector<64xf32>
    %20 = vector.shape_cast %19 : vector<64xf32> to vector<1x64xf32>
    %c0_6 = arith.constant 0 : index
    %c0_7 = arith.constant 0 : index
    %21 = vector.load %arg3[%c0_6, %c0_7] : memref<3x64xf32, #tpu.memory_space<vmem>>, vector<1x64xf32>
    %22 = arith.maximumf %21, %20 : vector<1x64xf32>
    %c0_8 = arith.constant 0 : index
    %c0_9 = arith.constant 0 : index
    %23 = vector.load %arg3[%c0_8, %c0_9] : memref<3x64xf32, #tpu.memory_space<vmem>>, vector<1x64xf32>
    tpu.vector_store %arg3[%c0_8, %c0_9], %22 {strides = array<i32>} : memref<3x64xf32, #tpu.memory_space<vmem>>, vector<1x64xf32>,
    %c1_i32 = arith.constant 1 : i32
    %24 = vector.broadcast %c1_i32 : i32 to vector<512x1xi32>
    %25 = arith.cmpi eq, %12, %24 : vector<512x1xi32>
    %cst_10 = arith.constant 0xFF800000 : f32
    %26 = vector.shape_cast %25 : vector<512x1xi1> to vector<512x1xi1>
    %27 = vector.broadcast %26 : vector<512x1xi1> to vector<512x64xi1>
    %28 = vector.broadcast %cst_10 : f32 to vector<512x64xf32>
    %29 = arith.select %27, %3, %28 : vector<512x64xi1>, vector<512x64xf32>
    %cst_11 = arith.constant dense<0xFF800000> : vector<64xf32>
    %30 = vector.multi_reduction <maximumf>, %29, %cst_11 [0] : vector<512x64xf32> to vector<64xf32>
    %31 = vector.shape_cast %30 : vector<64xf32> to vector<1x64xf32>
    %c1 = arith.constant 1 : index
    %c0_12 = arith.constant 0 : index
    %32 = vector.load %arg3[%c1, %c0_12] : memref<3x64xf32, #tpu.memory_space<vmem>>, vector<1x64xf32>
    %33 = arith.maximumf %32, %31 : vector<1x64xf32>
    %c1_13 = arith.constant 1 : index
    %c0_14 = arith.constant 0 : index
    %34 = vector.load %arg3[%c1_13, %c0_14] : memref<3x64xf32, #tpu.memory_space<vmem>>, vector<1x64xf32>
    tpu.vector_store %arg3[%c1_13, %c0_14], %33 {strides = array<i32>} : memref<3x64xf32, #tpu.memory_space<vmem>>, vector<1x64xf32>,
    %c2_i32 = arith.constant 2 : i32
    %35 = vector.broadcast %c2_i32 : i32 to vector<512x1xi32>
    %36 = arith.cmpi eq, %12, %35 : vector<512x1xi32>
    %cst_15 = arith.constant 0xFF800000 : f32
    %37 = vector.shape_cast %36 : vector<512x1xi1> to vector<512x1xi1>
    %38 = vector.broadcast %37 : vector<512x1xi1> to vector<512x64xi1>
    %39 = vector.broadcast %cst_15 : f32 to vector<512x64xf32>
    %40 = arith.select %38, %3, %39 : vector<512x64xi1>, vector<512x64xf32>
    %cst_16 = arith.constant dense<0xFF800000> : vector<64xf32>
    %41 = vector.multi_reduction <maximumf>, %40, %cst_16 [0] : vector<512x64xf32> to vector<64xf32>
    %42 = vector.shape_cast %41 : vector<64xf32> to vector<1x64xf32>
    %c2 = arith.constant 2 : index
    %c0_17 = arith.constant 0 : index
    %43 = vector.load %arg3[%c2, %c0_17] : memref<3x64xf32, #tpu.memory_space<vmem>>, vector<1x64xf32>
    %44 = arith.maximumf %43, %42 : vector<1x64xf32>
    %c2_18 = arith.constant 2 : index
    %c0_19 = arith.constant 0 : index
    %45 = vector.load %arg3[%c2_18, %c0_19] : memref<3x64xf32, #tpu.memory_space<vmem>>, vector<1x64xf32>
    tpu.vector_store %arg3[%c2_18, %c0_19], %44 {strides = array<i32>} : memref<3x64xf32, #tpu.memory_space<vmem>>, vector<1x64xf32>,
    return
  }
  func.func @transform_0(%arg0: i32) -> (i32, i32) {
    %c0_i32 = arith.constant 0 : i32
    %c0_i32_0 = arith.constant 0 : i32
    return %arg0, %c0_i32 : i32, i32
  }
  func.func @transform_1(%arg0: i32) -> (i32, i32) {
    %c0_i32 = arith.constant 0 : i32
    %c0_i32_0 = arith.constant 0 : i32
    return %arg0, %c0_i32 : i32, i32
  }
  func.func @transform_2(%arg0: i32) -> (i32, i32) {
    %c0_i32 = arith.constant 0 : i32
    %c0_i32_0 = arith.constant 0 : i32
    %c0_i32_1 = arith.constant 0 : i32
    return %c0_i32, %c0_i32_0 : i32, i32
  }
}

</mosaic_0001>

<llo_original>
// kernel: tpu_custom_call.1
$region0: #{tpu_custom_call.1}
  #allocation0 [shape = 'u32[]', space=smem, size = 0x4, offset = 0x4, fixed_abs, tag = 'smem constant byte address 0x4 - core index']
  #allocation1 [shape = 'u32[144,128]{1,0:T(1,128)}', space=vmem, size = 0x12000, scoped, tag = 'internal scratch']
  %s0 = inlined_call_operand.vmem [shape: f32[1200,64], index: 0, kind: input, shape index: {}]
  %s1 = inlined_call_operand.vmem [shape: s32[1200,1], index: 1, kind: input, shape index: {}]
  %s2 = inlined_call_operand.hbm [shape: f32[3,64], index: 2, kind: output, shape index: {}]
  %s3 = sld [smem:[#allocation0]]
  $region45: #{tpu_custom_call.1} parent=0
    _
  %s5 = ssub.s32 1, %s3
  %s6 = scalar_select 0, %s5, %s3
  $region1: #{tpu_custom_call.1} parent=0
    #allocation2 [shape = 'u8[2048]{0}', space=vmem, size = 0x800, scoped, tag = 'output window, operand 0, single buffered']
    #allocation3 [shape = 's32[2]{0}', space=sflag, size = 0x8, scoped, tag = 'scoped memory for tpu_custom_call.1']
    %7 = vsyncpa [#allocation3], 0
    loop: start=0, step=1, limit=5
    $region2: #{tpu_custom_call.1} parent=1 // loop_pre_header
      _
    $region3: #{tpu_custom_call.1} parent=1 // loop_header
      %s9 = sphi 0, %s13
      %p10 = scmp.ge.s32.totalorder %s9, 5
      %s19 = sphi 0, %s21
      %s22 = sphi 0, %s19
      %s23 = sphi 0, %s22
      %s39 = sphi 0, %s23
      %s45 = sphi 0, %s47
      %s48 = sphi 0, %s45
      %s49 = sphi 0, %s48
      %s65 = sphi 0, %s49
      %s69 = sphi 0, %s69
      %s71 = sphi 0, %s69
      %s72 = sphi 0, %s71
      %s86 = sphi 0, %s72
    $region4: #{tpu_custom_call.1} parent=1 // loop_header_branch
      %12 = sbr.rel (%p10) target = $region8
    $region5: #{tpu_custom_call.1} parent=1 // loop_body
      %s14 = ssub.s32 %s9, 1
      %s15 = ssub.s32 %s9, 2
      %s16 = sadd.s32 %s9, 1
      %s17 = ssub.s32 %s9, %s16
      %p18 = scmp.eq.s32.totalorder %s17, 0
      %s20 = sadd.s32 %s19, 1
      %s21 = scalar_select %p18, %s19, %s20
      %p24 = pneg %p18
      %p25 = scmp.eq.s32.totalorder %s9, 2
      %p26 = por %p24, %p25
      %p27 = scmp.ne.s32.totalorder %s19, %s22
      %p28 = scmp.eq.s32.totalorder %s9, 0
      %p29 = por %p27, %p28
      %p30 = scmp.ne.s32.totalorder %s19, %s22
      %p31 = scmp.eq.s32.totalorder %s14, 2
      %p32 = por %p30, %p31
      %p33 = scmp.ne.s32.totalorder %s22, %s23
      %p34 = scmp.eq.s32.totalorder %s14, 0
      %p35 = por %p33, %p34
      %p36 = scmp.ne.s32.totalorder %s22, %s23
      %p37 = scmp.eq.s32.totalorder %s15, 2
      %p38 = por %p36, %p37
      %p40 = scmp.ne.s32.totalorder %s23, %s39
      %p41 = scmp.eq.s32.totalorder %s15, 0
      %p42 = por %p40, %p41
      %s43 = ssub.s32 %s9, %s16
      %p44 = scmp.eq.s32.totalorder %s43, 0
      %s46 = sadd.s32 %s45, 1
      %s47 = scalar_select %p44, %s45, %s46
      %p50 = pneg %p44
      %p51 = scmp.eq.s32.totalorder %s9, 2
      %p52 = por %p50, %p51
      %p53 = scmp.ne.s32.totalorder %s45, %s48
      %p54 = scmp.eq.s32.totalorder %s9, 0
      %p55 = por %p53, %p54
      %p56 = scmp.ne.s32.totalorder %s45, %s48
      %p57 = scmp.eq.s32.totalorder %s14, 2
      %p58 = por %p56, %p57
      %p59 = scmp.ne.s32.totalorder %s48, %s49
      %p60 = scmp.eq.s32.totalorder %s14, 0
      %p61 = por %p59, %p60
      %p62 = scmp.ne.s32.totalorder %s48, %s49
      %p63 = scmp.eq.s32.totalorder %s15, 2
      %p64 = por %p62, %p63
      %p66 = scmp.ne.s32.totalorder %s49, %s65
      %p67 = scmp.eq.s32.totalorder %s15, 0
      %p68 = por %p66, %p67
      %s70 = sadd.s32 %s69, 1
      %p73 = scmp.eq.s32.totalorder %s9, 2
      %p74 = scmp.ne.s32.totalorder %s69, %s71
      %p75 = scmp.eq.s32.totalorder %s9, 0
      %p76 = por %p74, %p75
      %p77 = scmp.ne.s32.totalorder %s69, %s71
      %p78 = scmp.eq.s32.totalorder %s14, 2
      %p79 = por %p77, %p78
      %p80 = scmp.ne.s32.totalorder %s71, %s72
      %p81 = scmp.eq.s32.totalorder %s14, 0
      %p82 = por %p80, %p81
      %p83 = scmp.ne.s32.totalorder %s71, %s72
      %p84 = scmp.eq.s32.totalorder %s15, 2
      %p85 = por %p83, %p84
      %p87 = scmp.ne.s32.totalorder %s72, %s86
      %p88 = scmp.eq.s32.totalorder %s15, 0
      %p89 = por %p87, %p88
      %p90 = scmp.le.s32.totalorder 1, %s9
      %p91 = scmp.lt.s32.totalorder %s9, 4
      %p92 = pnand %p90, %p91
      %p93 = pneg %p92
      // Predicated region
      $region9: #{tpu_custom_call.1} parent=5 // pred_check
        _
      $region10: #{tpu_custom_call.1} parent=5 // pred_check_branch
        %95 = sbr.rel (%p92) target = $region12
      $region11: #{tpu_custom_call.1} parent=5 // pred_region
        %s96 = ssub.s32 %s9, 1
      $region12: #{tpu_custom_call.1} parent=5 // pred_fallthru
        _
      %p97 = scmp.lt.s32.totalorder %s9, 3
      // Predicated region
      $region13: #{tpu_custom_call.1} parent=5 // pred_check
        %p98 = pneg %p97
      $region14: #{tpu_custom_call.1} parent=5 // pred_check_branch
        %100 = sbr.rel (%p98) target = $region16
      $region15: #{tpu_custom_call.1} parent=5 // pred_region
        // Predicated region
        $region17: #{tpu_custom_call.1} parent=15 // pred_check
          %p101 = pneg %p29
        $region18: #{tpu_custom_call.1} parent=15 // pred_check_branch
          %103 = sbr.rel (%p101) target = $region20
        $region19: #{tpu_custom_call.1} parent=15 // pred_region
          %s104 = smul.u32 64, %s9
          %s105 = ssub.s32 150, %s104
          %p106 = scmp.lt.s32.totalorder %s105, 64
          %s107 = scalar_select %p106, %s105, 64
          %s108 = smul.u32 128, %s107
          %p109 = scmp.lt.s32.totalorder %s104, 149
          %s110 = scalar_select %p109, %s104, 149
          %s111 = smul.addr %s110, 8
          %s112 = scalar_lea.vmem %s0, %s111
          %s113 = smul.u32 64, %s9
          %s114 = ssub.s32 150, %s113
          %p115 = scmp.lt.s32.totalorder %s114, 64
          %s116 = scalar_select %p115, %s114, 64
          %s117 = smul.u32 128, %s116
        $region20: #{tpu_custom_call.1} parent=15 // pred_fallthru
          _
        // Predicated region
        $region21: #{tpu_custom_call.1} parent=15 // pred_check
          %p118 = pneg %p55
        $region22: #{tpu_custom_call.1} parent=15 // pred_check_branch
          %120 = sbr.rel (%p118) target = $region24
        $region23: #{tpu_custom_call.1} parent=15 // pred_region
          %s121 = smul.u32 64, %s9
          %s122 = ssub.s32 150, %s121
          %p123 = scmp.lt.s32.totalorder %s122, 64
          %s124 = scalar_select %p123, %s122, 64
          %s125 = smul.u32 128, %s124
          %p126 = scmp.lt.s32.totalorder %s121, 149
          %s127 = scalar_select %p126, %s121, 149
          %s128 = smul.addr %s127, 8
          %s129 = scalar_lea.vmem %s1, %s128
          %s130 = smul.u32 64, %s9
          %s131 = ssub.s32 150, %s130
          %p132 = scmp.lt.s32.totalorder %s131, 64
          %s133 = scalar_select %p132, %s131, 64
          %s134 = smul.u32 128, %s133
        $region24: #{tpu_custom_call.1} parent=15 // pred_fallthru
          _
      $region16: #{tpu_custom_call.1} parent=5 // pred_fallthru
        _
      %p135 = scmp.le.s32.totalorder 1, %s9
      %p136 = scmp.lt.s32.totalorder %s9, 4
      %p137 = pnand %p135, %p136
      %p138 = pneg %p137
      // Predicated region
      $region25: #{tpu_custom_call.1} parent=5 // pred_check
        _
      $region26: #{tpu_custom_call.1} parent=5 // pred_check_branch
        %140 = sbr.rel (%p137) target = $region28
      $region27: #{tpu_custom_call.1} parent=5 // pred_region
        %s141 = ssub.s32 %s9, 1
        %s142 = smul.u32 64, %s14
        %s143 = ssub.s32 150, %s142
        %p144 = scmp.lt.s32.totalorder %s143, 64
        %s145 = scalar_select %p144, %s143, 64
        %s146 = smul.u32 128, %s145
        %p147 = scmp.lt.s32.totalorder %s142, 149
        %s148 = scalar_select %p147, %s142, 149
        %s149 = smul.addr %s148, 8
        %s150 = scalar_lea.vmem %s0, %s149
        %p151 = pneg %p35
        %p152 = pneg %p32
        %s153 = smul.u32 64, %s14
        %s154 = ssub.s32 150, %s153
        %p155 = scmp.lt.s32.totalorder %s154, 64
        %s156 = scalar_select %p155, %s154, 64
        %s157 = smul.u32 128, %s156
        %p158 = scmp.lt.s32.totalorder %s153, 149
        %s159 = scalar_select %p158, %s153, 149
        %s160 = smul.addr %s159, 8
        %s161 = scalar_lea.vmem %s1, %s160
        %p162 = pneg %p61
        %p163 = pneg %p58
        %p164 = pneg %p82
        %p165 = pneg %p79
        %s166 = smul.u32 64, %s14
        %s167 = ssub.s32 150, %s166
        %p168 = scmp.lt.s32.totalorder %s167, 64
        %s169 = scalar_select %p168, %s167, 64
        %s170 = smul.u32 128, %s169
        %p171 = scmp.lt.s32.totalorder %s166, 149
        %s172 = scalar_select %p171, %s166, 149
        %s173 = smul.addr %s172, 8
        %s174 = scalar_lea.vmem %s0, %s173
        %s175 = smul.u32 64, %s14
        %s176 = ssub.s32 150, %s175
        %p177 = scmp.lt.s32.totalorder %s176, 64
        %s178 = scalar_select %p177, %s176, 64
        %s179 = smul.u32 128, %s178
        %s180 = smul.u32 64, %s14
        %s181 = ssub.s32 150, %s180
        %p182 = scmp.lt.s32.totalorder %s181, 64
        %s183 = scalar_select %p182, %s181, 64
        %s184 = smul.u32 128, %s183
        %p185 = scmp.lt.s32.totalorder %s180, 149
        %s186 = scalar_select %p185, %s180, 149
        %s187 = smul.addr %s186, 8
        %s188 = scalar_lea.vmem %s1, %s187
        %s189 = smul.u32 64, %s14
        %s190 = ssub.s32 150, %s189
        %p191 = scmp.lt.s32.totalorder %s190, 64
        %s192 = scalar_select %p191, %s190, 64
        %s193 = smul.u32 128, %s192
        %p194 = scmp.eq.s32.totalorder %s14, 0
        // Predicated region
        $region29: #{tpu_custom_call.1} parent=27 // pred_check
          %p195 = pneg %p194
        $region30: #{tpu_custom_call.1} parent=27 // pred_check_branch
          %197 = sbr.rel (%p195) target = $region32
        $region31: #{tpu_custom_call.1} parent=27 // pred_region
          %vm198 = vcmask 518144
          %199 = vst.msk [vmem:[#allocation2] sm:$0x7] %vm198, -inf
        $region32: #{tpu_custom_call.1} parent=27 // pred_fallthru
          _
        %v200 = vld [vmem:[%s174] sm:$0xff]
        %v201 = vld [vmem:[%s174 + $0x8] sm:$0xff]
        %v202 = vld [vmem:[%s174 + $0x10] sm:$0xff]
        %v203 = vld [vmem:[%s174 + $0x18] sm:$0xff]
        %v204 = vld [vmem:[%s174 + $0x20] sm:$0xff]
        %v205 = vld [vmem:[%s174 + $0x28] sm:$0xff]
        %v206 = vld [vmem:[%s174 + $0x30] sm:$0xff]
        %v207 = vld [vmem:[%s174 + $0x38] sm:$0xff]
        %v208 = vld [vmem:[%s174 + $0x40] sm:$0xff]
        %v209 = vld [vmem:[%s174 + $0x48] sm:$0xff]
        %v210 = vld [vmem:[%s174 + $0x50] sm:$0xff]
        %v211 = vld [vmem:[%s174 + $0x58] sm:$0xff]
        %v212 = vld [vmem:[%s174 + $0x60] sm:$0xff]
        %v213 = vld [vmem:[%s174 + $0x68] sm:$0xff]
        %v214 = vld [vmem:[%s174 + $0x70] sm:$0xff]
        %v215 = vld [vmem:[%s174 + $0x78] sm:$0xff]
        %v216 = vld [vmem:[%s174 + $0x80] sm:$0xff]
        %v217 = vld [vmem:[%s174 + $0x88] sm:$0xff]
        %v218 = vld [vmem:[%s174 + $0x90] sm:$0xff]
        %v219 = vld [vmem:[%s174 + $0x98] sm:$0xff]
        %v220 = vld [vmem:[%s174 + $0xa0] sm:$0xff]
        %v221 = vld [vmem:[%s174 + $0xa8] sm:$0xff]
        %v222 = vld [vmem:[%s174 + $0xb0] sm:$0xff]
        %v223 = vld [vmem:[%s174 + $0xb8] sm:$0xff]
        %v224 = vld [vmem:[%s174 + $0xc0] sm:$0xff]
        %v225 = vld [vmem:[%s174 + $0xc8] sm:$0xff]
        %v226 = vld [vmem:[%s174 + $0xd0] sm:$0xff]
        %v227 = vld [vmem:[%s174 + $0xd8] sm:$0xff]
        %v228 = vld [vmem:[%s174 + $0xe0] sm:$0xff]
        %v229 = vld [vmem:[%s174 + $0xe8] sm:$0xff]
        %v230 = vld [vmem:[%s174 + $0xf0] sm:$0xff]
        %v231 = vld [vmem:[%s174 + $0xf8] sm:$0xff]
        %v232 = vld [vmem:[%s174 + $0x100] sm:$0xff]
        %v233 = vld [vmem:[%s174 + $0x108] sm:$0xff]
        %v234 = vld [vmem:[%s174 + $0x110] sm:$0xff]
        %v235 = vld [vmem:[%s174 + $0x118] sm:$0xff]
        %v236 = vld [vmem:[%s174 + $0x120] sm:$0xff]
        %v237 = vld [vmem:[%s174 + $0x128] sm:$0xff]
        %v238 = vld [vmem:[%s174 + $0x130] sm:$0xff]
        %v239 = vld [vmem:[%s174 + $0x138] sm:$0xff]
        %v240 = vld [vmem:[%s174 + $0x140] sm:$0xff]
        %v241 = vld [vmem:[%s174 + $0x148] sm:$0xff]
        %v242 = vld [vmem:[%s174 + $0x150] sm:$0xff]
        %v243 = vld [vmem:[%s174 + $0x158] sm:$0xff]
        %v244 = vld [vmem:[%s174 + $0x160] sm:$0xff]
        %v245 = vld [vmem:[%s174 + $0x168] sm:$0xff]
        %v246 = vld [vmem:[%s174 + $0x170] sm:$0xff]
        %v247 = vld [vmem:[%s174 + $0x178] sm:$0xff]
        %v248 = vld [vmem:[%s174 + $0x180] sm:$0xff]
        %v249 = vld [vmem:[%s174 + $0x188] sm:$0xff]
        %v250 = vld [vmem:[%s174 + $0x190] sm:$0xff]
        %v251 = vld [vmem:[%s174 + $0x198] sm:$0xff]
        %v252 = vld [vmem:[%s174 + $0x1a0] sm:$0xff]
        %v253 = vld [vmem:[%s174 + $0x1a8] sm:$0xff]
        %v254 = vld [vmem:[%s174 + $0x1b0] sm:$0xff]
        %v255 = vld [vmem:[%s174 + $0x1b8] sm:$0xff]
        %v256 = vld [vmem:[%s174 + $0x1c0] sm:$0xff]
        %v257 = vld [vmem:[%s174 + $0x1c8] sm:$0xff]
        %v258 = vld [vmem:[%s174 + $0x1d0] sm:$0xff]
        %v259 = vld [vmem:[%s174 + $0x1d8] sm:$0xff]
        %v260 = vld [vmem:[%s174 + $0x1e0] sm:$0xff]
        %v261 = vld [vmem:[%s174 + $0x1e8] sm:$0xff]
        %v262 = vld [vmem:[%s174 + $0x1f0] sm:$0xff]
        %v263 = vld [vmem:[%s174 + $0x1f8] sm:$0xff]
        %v264 = vld [vmem:[%s188] sm:$0xff]
        %v265 = vld [vmem:[%s188 + $0x8] sm:$0xff]
        %v266 = vld [vmem:[%s188 + $0x10] sm:$0xff]
        %v267 = vld [vmem:[%s188 + $0x18] sm:$0xff]
        %v268 = vld [vmem:[%s188 + $0x20] sm:$0xff]
        %v269 = vld [vmem:[%s188 + $0x28] sm:$0xff]
        %v270 = vld [vmem:[%s188 + $0x30] sm:$0xff]
        %v271 = vld [vmem:[%s188 + $0x38] sm:$0xff]
        %v272 = vld [vmem:[%s188 + $0x40] sm:$0xff]
        %v273 = vld [vmem:[%s188 + $0x48] sm:$0xff]
        %v274 = vld [vmem:[%s188 + $0x50] sm:$0xff]
        %v275 = vld [vmem:[%s188 + $0x58] sm:$0xff]
        %v276 = vld [vmem:[%s188 + $0x60] sm:$0xff]
        %v277 = vld [vmem:[%s188 + $0x68] sm:$0xff]
        %v278 = vld [vmem:[%s188 + $0x70] sm:$0xff]
        %v279 = vld [vmem:[%s188 + $0x78] sm:$0xff]
        %v280 = vld [vmem:[%s188 + $0x80] sm:$0xff]
        %v281 = vld [vmem:[%s188 + $0x88] sm:$0xff]
        %v282 = vld [vmem:[%s188 + $0x90] sm:$0xff]
        %v283 = vld [vmem:[%s188 + $0x98] sm:$0xff]
        %v284 = vld [vmem:[%s188 + $0xa0] sm:$0xff]
        %v285 = vld [vmem:[%s188 + $0xa8] sm:$0xff]
        %v286 = vld [vmem:[%s188 + $0xb0] sm:$0xff]
        %v287 = vld [vmem:[%s188 + $0xb8] sm:$0xff]
        %v288 = vld [vmem:[%s188 + $0xc0] sm:$0xff]
        %v289 = vld [vmem:[%s188 + $0xc8] sm:$0xff]
        %v290 = vld [vmem:[%s188 + $0xd0] sm:$0xff]
        %v291 = vld [vmem:[%s188 + $0xd8] sm:$0xff]
        %v292 = vld [vmem:[%s188 + $0xe0] sm:$0xff]
        %v293 = vld [vmem:[%s188 + $0xe8] sm:$0xff]
        %v294 = vld [vmem:[%s188 + $0xf0] sm:$0xff]
        %v295 = vld [vmem:[%s188 + $0xf8] sm:$0xff]
        %v296 = vld [vmem:[%s188 + $0x100] sm:$0xff]
        %v297 = vld [vmem:[%s188 + $0x108] sm:$0xff]
        %v298 = vld [vmem:[%s188 + $0x110] sm:$0xff]
        %v299 = vld [vmem:[%s188 + $0x118] sm:$0xff]
        %v300 = vld [vmem:[%s188 + $0x120] sm:$0xff]
        %v301 = vld [vmem:[%s188 + $0x128] sm:$0xff]
        %v302 = vld [vmem:[%s188 + $0x130] sm:$0xff]
        %v303 = vld [vmem:[%s188 + $0x138] sm:$0xff]
        %v304 = vld [vmem:[%s188 + $0x140] sm:$0xff]
        %v305 = vld [vmem:[%s188 + $0x148] sm:$0xff]
        %v306 = vld [vmem:[%s188 + $0x150] sm:$0xff]
        %v307 = vld [vmem:[%s188 + $0x158] sm:$0xff]
        %v308 = vld [vmem:[%s188 + $0x160] sm:$0xff]
        %v309 = vld [vmem:[%s188 + $0x168] sm:$0xff]
        %v310 = vld [vmem:[%s188 + $0x170] sm:$0xff]
        %v311 = vld [vmem:[%s188 + $0x178] sm:$0xff]
        %v312 = vld [vmem:[%s188 + $0x180] sm:$0xff]
        %v313 = vld [vmem:[%s188 + $0x188] sm:$0xff]
        %v314 = vld [vmem:[%s188 + $0x190] sm:$0xff]
        %v315 = vld [vmem:[%s188 + $0x198] sm:$0xff]
        %v316 = vld [vmem:[%s188 + $0x1a0] sm:$0xff]
        %v317 = vld [vmem:[%s188 + $0x1a8] sm:$0xff]
        %v318 = vld [vmem:[%s188 + $0x1b0] sm:$0xff]
        %v319 = vld [vmem:[%s188 + $0x1b8] sm:$0xff]
        %v320 = vld [vmem:[%s188 + $0x1c0] sm:$0xff]
        %v321 = vld [vmem:[%s188 + $0x1c8] sm:$0xff]
        %v322 = vld [vmem:[%s188 + $0x1d0] sm:$0xff]
        %v323 = vld [vmem:[%s188 + $0x1d8] sm:$0xff]
        %v324 = vld [vmem:[%s188 + $0x1e0] sm:$0xff]
        %v325 = vld [vmem:[%s188 + $0x1e8] sm:$0xff]
        %v326 = vld [vmem:[%s188 + $0x1f0] sm:$0xff]
        %v327 = vld [vmem:[%s188 + $0x1f8] sm:$0xff]
        %s328 = smul.u32 %s14, 512
        %v329 = vlaneseq
        %v330 = vshrl.u32 %v329, 7
        %v331 = vadd.s32 %v330, 8
        %v332 = vadd.s32 %v330, 16
        %v333 = vadd.s32 %v330, 24
        %v334 = vadd.s32 %v330, 32
        %v335 = vadd.s32 %v330, 40
        %v336 = vadd.s32 %v330, 48
        %v337 = vadd.s32 %v330, 56
        %v338 = vadd.s32 %v330, 64
        %v339 = vadd.s32 %v330, 72
        %v340 = vadd.s32 %v330, 80
        %v341 = vadd.s32 %v330, 88
        %v342 = vadd.s32 %v330, 96
        %v343 = vadd.s32 %v330, 104
        %v344 = vadd.s32 %v330, 112
        %v345 = vadd.s32 %v330, 120
        %v346 = vadd.s32 %v330, 128
        %v347 = vadd.s32 %v330, 136
        %v348 = vadd.s32 %v330, 144
        %v349 = vadd.s32 %v330, 152
        %v350 = vadd.s32 %v330, 160
        %v351 = vadd.s32 %v330, 168
        %v352 = vadd.s32 %v330, 176
        %v353 = vadd.s32 %v330, 184
        %v354 = vadd.s32 %v330, 192
        %v355 = vadd.s32 %v330, 200
        %v356 = vadd.s32 %v330, 208
        %v357 = vadd.s32 %v330, 216
        %v358 = vadd.s32 %v330, 224
        %v359 = vadd.s32 %v330, 232
        %v360 = vadd.s32 %v330, 240
        %v361 = vadd.s32 %v330, 248
        %v362 = vadd.s32 %v330, 256
        %v363 = vadd.s32 %v330, 264
        %v364 = vadd.s32 %v330, 272
        %v365 = vadd.s32 %v330, 280
        %v366 = vadd.s32 %v330, 288
        %v367 = vadd.s32 %v330, 296
        %v368 = vadd.s32 %v330, 304
        %v369 = vadd.s32 %v330, 312
        %v370 = vadd.s32 %v330, 320
        %v371 = vadd.s32 %v330, 328
        %v372 = vadd.s32 %v330, 336
        %v373 = vadd.s32 %v330, 344
        %v374 = vadd.s32 %v330, 352
        %v375 = vadd.s32 %v330, 360
        %v376 = vadd.s32 %v330, 368
        %v377 = vadd.s32 %v330, 376
        %v378 = vadd.s32 %v330, 384
        %v379 = vadd.s32 %v330, 392
        %v380 = vadd.s32 %v330, 400
        %v381 = vadd.s32 %v330, 408
        %v382 = vadd.s32 %v330, 416
        %v383 = vadd.s32 %v330, 424
        %v384 = vadd.s32 %v330, 432
        %v385 = vadd.s32 %v330, 440
        %v386 = vadd.s32 %v330, 448
        %v387 = vadd.s32 %v330, 456
        %v388 = vadd.s32 %v330, 464
        %v389 = vadd.s32 %v330, 472
        %v390 = vadd.s32 %v330, 480
        %v391 = vadd.s32 %v330, 488
        %v392 = vadd.s32 %v330, 496
        %v393 = vadd.s32 %v330, 504
        %v394 = vstv %s328
        %v395 = vadd.s32 %v394, %v330
        %v396 = vadd.s32 %v394, %v331
        %v397 = vadd.s32 %v394, %v332
        %v398 = vadd.s32 %v394, %v333
        %v399 = vadd.s32 %v394, %v334
        %v400 = vadd.s32 %v394, %v335
        %v401 = vadd.s32 %v394, %v336
        %v402 = vadd.s32 %v394, %v337
        %v403 = vadd.s32 %v394, %v338
        %v404 = vadd.s32 %v394, %v339
        %v405 = vadd.s32 %v394, %v340
        %v406 = vadd.s32 %v394, %v341
        %v407 = vadd.s32 %v394, %v342
        %v408 = vadd.s32 %v394, %v343
        %v409 = vadd.s32 %v394, %v344
        %v410 = vadd.s32 %v394, %v345
        %v411 = vadd.s32 %v394, %v346
        %v412 = vadd.s32 %v394, %v347
        %v413 = vadd.s32 %v394, %v348
        %v414 = vadd.s32 %v394, %v349
        %v415 = vadd.s32 %v394, %v350
        %v416 = vadd.s32 %v394, %v351
        %v417 = vadd.s32 %v394, %v352
        %v418 = vadd.s32 %v394, %v353
        %v419 = vadd.s32 %v394, %v354
        %v420 = vadd.s32 %v394, %v355
        %v421 = vadd.s32 %v394, %v356
        %v422 = vadd.s32 %v394, %v357
        %v423 = vadd.s32 %v394, %v358
        %v424 = vadd.s32 %v394, %v359
        %v425 = vadd.s32 %v394, %v360
        %v426 = vadd.s32 %v394, %v361
        %v427 = vadd.s32 %v394, %v362
        %v428 = vadd.s32 %v394, %v363
        %v429 = vadd.s32 %v394, %v364
        %v430 = vadd.s32 %v394, %v365
        %v431 = vadd.s32 %v394, %v366
        %v432 = vadd.s32 %v394, %v367
        %v433 = vadd.s32 %v394, %v368
        %v434 = vadd.s32 %v394, %v369
        %v435 = vadd.s32 %v394, %v370
        %v436 = vadd.s32 %v394, %v371
        %v437 = vadd.s32 %v394, %v372
        %v438 = vadd.s32 %v394, %v373
        %v439 = vadd.s32 %v394, %v374
        %v440 = vadd.s32 %v394, %v375
        %v441 = vadd.s32 %v394, %v376
        %v442 = vadd.s32 %v394, %v377
        %v443 = vadd.s32 %v394, %v378
        %v444 = vadd.s32 %v394, %v379
        %v445 = vadd.s32 %v394, %v380
        %v446 = vadd.s32 %v394, %v381
        %v447 = vadd.s32 %v394, %v382
        %v448 = vadd.s32 %v394, %v383
        %v449 = vadd.s32 %v394, %v384
        %v450 = vadd.s32 %v394, %v385
        %v451 = vadd.s32 %v394, %v386
        %v452 = vadd.s32 %v394, %v387
        %v453 = vadd.s32 %v394, %v388
        %v454 = vadd.s32 %v394, %v389
        %v455 = vadd.s32 %v394, %v390
        %v456 = vadd.s32 %v394, %v391
        %v457 = vadd.s32 %v394, %v392
        %v458 = vadd.s32 %v394, %v393
        %vm459 = vcmp.lt.s32.totalorder %v395, 1200
        %vm460 = vcmp.lt.s32.totalorder %v396, 1200
        %vm461 = vcmp.lt.s32.totalorder %v397, 1200
        %vm462 = vcmp.lt.s32.totalorder %v398, 1200
        %vm463 = vcmp.lt.s32.totalorder %v399, 1200
        %vm464 = vcmp.lt.s32.totalorder %v400, 1200
        %vm465 = vcmp.lt.s32.totalorder %v401, 1200
        %vm466 = vcmp.lt.s32.totalorder %v402, 1200
        %vm467 = vcmp.lt.s32.totalorder %v403, 1200
        %vm468 = vcmp.lt.s32.totalorder %v404, 1200
        %vm469 = vcmp.lt.s32.totalorder %v405, 1200
        %vm470 = vcmp.lt.s32.totalorder %v406, 1200
        %vm471 = vcmp.lt.s32.totalorder %v407, 1200
        %vm472 = vcmp.lt.s32.totalorder %v408, 1200
        %vm473 = vcmp.lt.s32.totalorder %v409, 1200
        %vm474 = vcmp.lt.s32.totalorder %v410, 1200
        %vm475 = vcmp.lt.s32.totalorder %v411, 1200
        %vm476 = vcmp.lt.s32.totalorder %v412, 1200
        %vm477 = vcmp.lt.s32.totalorder %v413, 1200
        %vm478 = vcmp.lt.s32.totalorder %v414, 1200
        %vm479 = vcmp.lt.s32.totalorder %v415, 1200
        %vm480 = vcmp.lt.s32.totalorder %v416, 1200
        %vm481 = vcmp.lt.s32.totalorder %v417, 1200
        %vm482 = vcmp.lt.s32.totalorder %v418, 1200
        %vm483 = vcmp.lt.s32.totalorder %v419, 1200
        %vm484 = vcmp.lt.s32.totalorder %v420, 1200
        %vm485 = vcmp.lt.s32.totalorder %v421, 1200
        %vm486 = vcmp.lt.s32.totalorder %v422, 1200
        %vm487 = vcmp.lt.s32.totalorder %v423, 1200
        %vm488 = vcmp.lt.s32.totalorder %v424, 1200
        %vm489 = vcmp.lt.s32.totalorder %v425, 1200
        %vm490 = vcmp.lt.s32.totalorder %v426, 1200
        %vm491 = vcmp.lt.s32.totalorder %v427, 1200
        %vm492 = vcmp.lt.s32.totalorder %v428, 1200
        %vm493 = vcmp.lt.s32.totalorder %v429, 1200
        %vm494 = vcmp.lt.s32.totalorder %v430, 1200
        %vm495 = vcmp.lt.s32.totalorder %v431, 1200
        %vm496 = vcmp.lt.s32.totalorder %v432, 1200
        %vm497 = vcmp.lt.s32.totalorder %v433, 1200
        %vm498 = vcmp.lt.s32.totalorder %v434, 1200
        %vm499 = vcmp.lt.s32.totalorder %v435, 1200
        %vm500 = vcmp.lt.s32.totalorder %v436, 1200
        %vm501 = vcmp.lt.s32.totalorder %v437, 1200
        %vm502 = vcmp.lt.s32.totalorder %v438, 1200
        %vm503 = vcmp.lt.s32.totalorder %v439, 1200
        %vm504 = vcmp.lt.s32.totalorder %v440, 1200
        %vm505 = vcmp.lt.s32.totalorder %v441, 1200
        %vm506 = vcmp.lt.s32.totalorder %v442, 1200
        %vm507 = vcmp.lt.s32.totalorder %v443, 1200
        %vm508 = vcmp.lt.s32.totalorder %v444, 1200
        %vm509 = vcmp.lt.s32.totalorder %v445, 1200
        %vm510 = vcmp.lt.s32.totalorder %v446, 1200
        %vm511 = vcmp.lt.s32.totalorder %v447, 1200
        %vm512 = vcmp.lt.s32.totalorder %v448, 1200
        %vm513 = vcmp.lt.s32.totalorder %v449, 1200
        %vm514 = vcmp.lt.s32.totalorder %v450, 1200
        %vm515 = vcmp.lt.s32.totalorder %v451, 1200
        %vm516 = vcmp.lt.s32.totalorder %v452, 1200
        %vm517 = vcmp.lt.s32.totalorder %v453, 1200
        %vm518 = vcmp.lt.s32.totalorder %v454, 1200
        %vm519 = vcmp.lt.s32.totalorder %v455, 1200
        %vm520 = vcmp.lt.s32.totalorder %v456, 1200
        %vm521 = vcmp.lt.s32.totalorder %v457, 1200
        %vm522 = vcmp.lt.s32.totalorder %v458, 1200
        %v523 = vsel %vm459, %v264, 4294967295
        %v524 = vsel %vm460, %v265, 4294967295
        %v525 = vsel %vm461, %v266, 4294967295
        %v526 = vsel %vm462, %v267, 4294967295
        %v527 = vsel %vm463, %v268, 4294967295
        %v528 = vsel %vm464, %v269, 4294967295
        %v529 = vsel %vm465, %v270, 4294967295
        %v530 = vsel %vm466, %v271, 4294967295
        %v531 = vsel %vm467, %v272, 4294967295
        %v532 = vsel %vm468, %v273, 4294967295
        %v533 = vsel %vm469, %v274, 4294967295
        %v534 = vsel %vm470, %v275, 4294967295
        %v535 = vsel %vm471, %v276, 4294967295
        %v536 = vsel %vm472, %v277, 4294967295
        %v537 = vsel %vm473, %v278, 4294967295
        %v538 = vsel %vm474, %v279, 4294967295
        %v539 = vsel %vm475, %v280, 4294967295
        %v540 = vsel %vm476, %v281, 4294967295
        %v541 = vsel %vm477, %v282, 4294967295
        %v542 = vsel %vm478, %v283, 4294967295
        %v543 = vsel %vm479, %v284, 4294967295
        %v544 = vsel %vm480, %v285, 4294967295
        %v545 = vsel %vm481, %v286, 4294967295
        %v546 = vsel %vm482, %v287, 4294967295
        %v547 = vsel %vm483, %v288, 4294967295
        %v548 = vsel %vm484, %v289, 4294967295
        %v549 = vsel %vm485, %v290, 4294967295
        %v550 = vsel %vm486, %v291, 4294967295
        %v551 = vsel %vm487, %v292, 4294967295
        %v552 = vsel %vm488, %v293, 4294967295
        %v553 = vsel %vm489, %v294, 4294967295
        %v554 = vsel %vm490, %v295, 4294967295
        %v555 = vsel %vm491, %v296, 4294967295
        %v556 = vsel %vm492, %v297, 4294967295
        %v557 = vsel %vm493, %v298, 4294967295
        %v558 = vsel %vm494, %v299, 4294967295
        %v559 = vsel %vm495, %v300, 4294967295
        %v560 = vsel %vm496, %v301, 4294967295
        %v561 = vsel %vm497, %v302, 4294967295
        %v562 = vsel %vm498, %v303, 4294967295
        %v563 = vsel %vm499, %v304, 4294967295
        %v564 = vsel %vm500, %v305, 4294967295
        %v565 = vsel %vm501, %v306, 4294967295
        %v566 = vsel %vm502, %v307, 4294967295
        %v567 = vsel %vm503, %v308, 4294967295
        %v568 = vsel %vm504, %v309, 4294967295
        %v569 = vsel %vm505, %v310, 4294967295
        %v570 = vsel %vm506, %v311, 4294967295
        %v571 = vsel %vm507, %v312, 4294967295
        %v572 = vsel %vm508, %v313, 4294967295
        %v573 = vsel %vm509, %v314, 4294967295
        %v574 = vsel %vm510, %v315, 4294967295
        %v575 = vsel %vm511, %v316, 4294967295
        %v576 = vsel %vm512, %v317, 4294967295
        %v577 = vsel %vm513, %v318, 4294967295
        %v578 = vsel %vm514, %v319, 4294967295
        %v579 = vsel %vm515, %v320, 4294967295
        %v580 = vsel %vm516, %v321, 4294967295
        %v581 = vsel %vm517, %v322, 4294967295
        %v582 = vsel %vm518, %v323, 4294967295
        %v583 = vsel %vm519, %v324, 4294967295
        %v584 = vsel %vm520, %v325, 4294967295
        %v585 = vsel %vm521, %v326, 4294967295
        %v586 = vsel %vm522, %v327, 4294967295
        %vm587 = vcmp.eq.s32.totalorder %v523, 0
        %vm588 = vcmp.eq.s32.totalorder %v524, 0
        %vm589 = vcmp.eq.s32.totalorder %v525, 0
        %vm590 = vcmp.eq.s32.totalorder %v526, 0
        %vm591 = vcmp.eq.s32.totalorder %v527, 0
        %vm592 = vcmp.eq.s32.totalorder %v528, 0
        %vm593 = vcmp.eq.s32.totalorder %v529, 0
        %vm594 = vcmp.eq.s32.totalorder %v530, 0
        %vm595 = vcmp.eq.s32.totalorder %v531, 0
        %vm596 = vcmp.eq.s32.totalorder %v532, 0
        %vm597 = vcmp.eq.s32.totalorder %v533, 0
        %vm598 = vcmp.eq.s32.totalorder %v534, 0
        %vm599 = vcmp.eq.s32.totalorder %v535, 0
        %vm600 = vcmp.eq.s32.totalorder %v536, 0
        %vm601 = vcmp.eq.s32.totalorder %v537, 0
        %vm602 = vcmp.eq.s32.totalorder %v538, 0
        %vm603 = vcmp.eq.s32.totalorder %v539, 0
        %vm604 = vcmp.eq.s32.totalorder %v540, 0
        %vm605 = vcmp.eq.s32.totalorder %v541, 0
        %vm606 = vcmp.eq.s32.totalorder %v542, 0
        %vm607 = vcmp.eq.s32.totalorder %v543, 0
        %vm608 = vcmp.eq.s32.totalorder %v544, 0
        %vm609 = vcmp.eq.s32.totalorder %v545, 0
        %vm610 = vcmp.eq.s32.totalorder %v546, 0
        %vm611 = vcmp.eq.s32.totalorder %v547, 0
        %vm612 = vcmp.eq.s32.totalorder %v548, 0
        %vm613 = vcmp.eq.s32.totalorder %v549, 0
        %vm614 = vcmp.eq.s32.totalorder %v550, 0
        %vm615 = vcmp.eq.s32.totalorder %v551, 0
        %vm616 = vcmp.eq.s32.totalorder %v552, 0
        %vm617 = vcmp.eq.s32.totalorder %v553, 0
        %vm618 = vcmp.eq.s32.totalorder %v554, 0
        %vm619 = vcmp.eq.s32.totalorder %v555, 0
        %vm620 = vcmp.eq.s32.totalorder %v556, 0
        %vm621 = vcmp.eq.s32.totalorder %v557, 0
        %vm622 = vcmp.eq.s32.totalorder %v558, 0
        %vm623 = vcmp.eq.s32.totalorder %v559, 0
        %vm624 = vcmp.eq.s32.totalorder %v560, 0
        %vm625 = vcmp.eq.s32.totalorder %v561, 0
        %vm626 = vcmp.eq.s32.totalorder %v562, 0
        %vm627 = vcmp.eq.s32.totalorder %v563, 0
        %vm628 = vcmp.eq.s32.totalorder %v564, 0
        %vm629 = vcmp.eq.s32.totalorder %v565, 0
        %vm630 = vcmp.eq.s32.totalorder %v566, 0
        %vm631 = vcmp.eq.s32.totalorder %v567, 0
        %vm632 = vcmp.eq.s32.totalorder %v568, 0
        %vm633 = vcmp.eq.s32.totalorder %v569, 0
        %vm634 = vcmp.eq.s32.totalorder %v570, 0
        %vm635 = vcmp.eq.s32.totalorder %v571, 0
        %vm636 = vcmp.eq.s32.totalorder %v572, 0
        %vm637 = vcmp.eq.s32.totalorder %v573, 0
        %vm638 = vcmp.eq.s32.totalorder %v574, 0
        %vm639 = vcmp.eq.s32.totalorder %v575, 0
        %vm640 = vcmp.eq.s32.totalorder %v576, 0
        %vm641 = vcmp.eq.s32.totalorder %v577, 0
        %vm642 = vcmp.eq.s32.totalorder %v578, 0
        %vm643 = vcmp.eq.s32.totalorder %v579, 0
        %vm644 = vcmp.eq.s32.totalorder %v580, 0
        %vm645 = vcmp.eq.s32.totalorder %v581, 0
        %vm646 = vcmp.eq.s32.totalorder %v582, 0
        %vm647 = vcmp.eq.s32.totalorder %v583, 0
        %vm648 = vcmp.eq.s32.totalorder %v584, 0
        %vm649 = vcmp.eq.s32.totalorder %v585, 0
        %vm650 = vcmp.eq.s32.totalorder %v586, 0
        %v651 = vsel %vm587, 1, 0
        %v652 = vsel %vm588, 1, 0
        %v653 = vsel %vm589, 1, 0
        %v654 = vsel %vm590, 1, 0
        %v655 = vsel %vm591, 1, 0
        %v656 = vsel %vm592, 1, 0
        %v657 = vsel %vm593, 1, 0
        %v658 = vsel %vm594, 1, 0
        %v659 = vsel %vm595, 1, 0
        %v660 = vsel %vm596, 1, 0
        %v661 = vsel %vm597, 1, 0
        %v662 = vsel %vm598, 1, 0
        %v663 = vsel %vm599, 1, 0
        %v664 = vsel %vm600, 1, 0
        %v665 = vsel %vm601, 1, 0
        %v666 = vsel %vm602, 1, 0
        %v667 = vsel %vm603, 1, 0
        %v668 = vsel %vm604, 1, 0
        %v669 = vsel %vm605, 1, 0
        %v670 = vsel %vm606, 1, 0
        %v671 = vsel %vm607, 1, 0
        %v672 = vsel %vm608, 1, 0
        %v673 = vsel %vm609, 1, 0
        %v674 = vsel %vm610, 1, 0
        %v675 = vsel %vm611, 1, 0
        %v676 = vsel %vm612, 1, 0
        %v677 = vsel %vm613, 1, 0
        %v678 = vsel %vm614, 1, 0
        %v679 = vsel %vm615, 1, 0
        %v680 = vsel %vm616, 1, 0
        %v681 = vsel %vm617, 1, 0
        %v682 = vsel %vm618, 1, 0
        %v683 = vsel %vm619, 1, 0
        %v684 = vsel %vm620, 1, 0
        %v685 = vsel %vm621, 1, 0
        %v686 = vsel %vm622, 1, 0
        %v687 = vsel %vm623, 1, 0
        %v688 = vsel %vm624, 1, 0
        %v689 = vsel %vm625, 1, 0
        %v690 = vsel %vm626, 1, 0
        %v691 = vsel %vm627, 1, 0
        %v692 = vsel %vm628, 1, 0
        %v693 = vsel %vm629, 1, 0
        %v694 = vsel %vm630, 1, 0
        %v695 = vsel %vm631, 1, 0
        %v696 = vsel %vm632, 1, 0
        %v697 = vsel %vm633, 1, 0
        %v698 = vsel %vm634, 1, 0
        %v699 = vsel %vm635, 1, 0
        %v700 = vsel %vm636, 1, 0
        %v701 = vsel %vm637, 1, 0
        %v702 = vsel %vm638, 1, 0
        %v703 = vsel %vm639, 1, 0
        %v704 = vsel %vm640, 1, 0
        %v705 = vsel %vm641, 1, 0
        %v706 = vsel %vm642, 1, 0
        %v707 = vsel %vm643, 1, 0
        %v708 = vsel %vm644, 1, 0
        %v709 = vsel %vm645, 1, 0
        %v710 = vsel %vm646, 1, 0
        %v711 = vsel %vm647, 1, 0
        %v712 = vsel %vm648, 1, 0
        %v713 = vsel %vm649, 1, 0
        %v714 = vsel %vm650, 1, 0
        %715 = vset.pattern.permute.xlu0 0
        %716 = vperm.xlu0 %715, %v651
        %v717 = vpop.permute.xlu0 %716
        %718 = vset.pattern.permute.xlu0 0
        %719 = vperm.xlu0 %718, %v652
        %v720 = vpop.permute.xlu0 %719
        %721 = vset.pattern.permute.xlu0 0
        %722 = vperm.xlu0 %721, %v653
        %v723 = vpop.permute.xlu0 %722
        %724 = vset.pattern.permute.xlu0 0
        %725 = vperm.xlu0 %724, %v654
        %v726 = vpop.permute.xlu0 %725
        %727 = vset.pattern.permute.xlu0 0
        %728 = vperm.xlu0 %727, %v655
        %v729 = vpop.permute.xlu0 %728
        %730 = vset.pattern.permute.xlu0 0
        %731 = vperm.xlu0 %730, %v656
        %v732 = vpop.permute.xlu0 %731
        %733 = vset.pattern.permute.xlu0 0
        %734 = vperm.xlu0 %733, %v657
        %v735 = vpop.permute.xlu0 %734
        %736 = vset.pattern.permute.xlu0 0
        %737 = vperm.xlu0 %736, %v658
        %v738 = vpop.permute.xlu0 %737
        %739 = vset.pattern.permute.xlu0 0
        %740 = vperm.xlu0 %739, %v659
        %v741 = vpop.permute.xlu0 %740
        %742 = vset.pattern.permute.xlu0 0
        %743 = vperm.xlu0 %742, %v660
        %v744 = vpop.permute.xlu0 %743
        %745 = vset.pattern.permute.xlu0 0
        %746 = vperm.xlu0 %745, %v661
        %v747 = vpop.permute.xlu0 %746
        %748 = vset.pattern.permute.xlu0 0
        %749 = vperm.xlu0 %748, %v662
        %v750 = vpop.permute.xlu0 %749
        %751 = vset.pattern.permute.xlu0 0
        %752 = vperm.xlu0 %751, %v663
        %v753 = vpop.permute.xlu0 %752
        %754 = vset.pattern.permute.xlu0 0
        %755 = vperm.xlu0 %754, %v664
        %v756 = vpop.permute.xlu0 %755
        %757 = vset.pattern.permute.xlu0 0
        %758 = vperm.xlu0 %757, %v665
        %v759 = vpop.permute.xlu0 %758
        %760 = vset.pattern.permute.xlu0 0
        %761 = vperm.xlu0 %760, %v666
        %v762 = vpop.permute.xlu0 %761
        %763 = vset.pattern.permute.xlu0 0
        %764 = vperm.xlu0 %763, %v667
        %v765 = vpop.permute.xlu0 %764
        %766 = vset.pattern.permute.xlu0 0
        %767 = vperm.xlu0 %766, %v668
        %v768 = vpop.permute.xlu0 %767
        %769 = vset.pattern.permute.xlu0 0
        %770 = vperm.xlu0 %769, %v669
        %v771 = vpop.permute.xlu0 %770
        %772 = vset.pattern.permute.xlu0 0
        %773 = vperm.xlu0 %772, %v670
        %v774 = vpop.permute.xlu0 %773
        %775 = vset.pattern.permute.xlu0 0
        %776 = vperm.xlu0 %775, %v671
        %v777 = vpop.permute.xlu0 %776
        %778 = vset.pattern.permute.xlu0 0
        %779 = vperm.xlu0 %778, %v672
        %v780 = vpop.permute.xlu0 %779
        %781 = vset.pattern.permute.xlu0 0
        %782 = vperm.xlu0 %781, %v673
        %v783 = vpop.permute.xlu0 %782
        %784 = vset.pattern.permute.xlu0 0
        %785 = vperm.xlu0 %784, %v674
        %v786 = vpop.permute.xlu0 %785
        %787 = vset.pattern.permute.xlu0 0
        %788 = vperm.xlu0 %787, %v675
        %v789 = vpop.permute.xlu0 %788
        %790 = vset.pattern.permute.xlu0 0
        %791 = vperm.xlu0 %790, %v676
        %v792 = vpop.permute.xlu0 %791
        %793 = vset.pattern.permute.xlu0 0
        %794 = vperm.xlu0 %793, %v677
        %v795 = vpop.permute.xlu0 %794
        %796 = vset.pattern.permute.xlu0 0
        %797 = vperm.xlu0 %796, %v678
        %v798 = vpop.permute.xlu0 %797
        %799 = vset.pattern.permute.xlu0 0
        %800 = vperm.xlu0 %799, %v679
        %v801 = vpop.permute.xlu0 %800
        %802 = vset.pattern.permute.xlu0 0
        %803 = vperm.xlu0 %802, %v680
        %v804 = vpop.permute.xlu0 %803
        %805 = vset.pattern.permute.xlu0 0
        %806 = vperm.xlu0 %805, %v681
        %v807 = vpop.permute.xlu0 %806
        %808 = vset.pattern.permute.xlu0 0
        %809 = vperm.xlu0 %808, %v682
        %v810 = vpop.permute.xlu0 %809
        %811 = vset.pattern.permute.xlu0 0
        %812 = vperm.xlu0 %811, %v683
        %v813 = vpop.permute.xlu0 %812
        %814 = vset.pattern.permute.xlu0 0
        %815 = vperm.xlu0 %814, %v684
        %v816 = vpop.permute.xlu0 %815
        %817 = vset.pattern.permute.xlu0 0
        %818 = vperm.xlu0 %817, %v685
        %v819 = vpop.permute.xlu0 %818
        %820 = vset.pattern.permute.xlu0 0
        %821 = vperm.xlu0 %820, %v686
        %v822 = vpop.permute.xlu0 %821
        %823 = vset.pattern.permute.xlu0 0
        %824 = vperm.xlu0 %823, %v687
        %v825 = vpop.permute.xlu0 %824
        %826 = vset.pattern.permute.xlu0 0
        %827 = vperm.xlu0 %826, %v688
        %v828 = vpop.permute.xlu0 %827
        %829 = vset.pattern.permute.xlu0 0
        %830 = vperm.xlu0 %829, %v689
        %v831 = vpop.permute.xlu0 %830
        %832 = vset.pattern.permute.xlu0 0
        %833 = vperm.xlu0 %832, %v690
        %v834 = vpop.permute.xlu0 %833
        %835 = vset.pattern.permute.xlu0 0
        %836 = vperm.xlu0 %835, %v691
        %v837 = vpop.permute.xlu0 %836
        %838 = vset.pattern.permute.xlu0 0
        %839 = vperm.xlu0 %838, %v692
        %v840 = vpop.permute.xlu0 %839
        %841 = vset.pattern.permute.xlu0 0
        %842 = vperm.xlu0 %841, %v693
        %v843 = vpop.permute.xlu0 %842
        %844 = vset.pattern.permute.xlu0 0
        %845 = vperm.xlu0 %844, %v694
        %v846 = vpop.permute.xlu0 %845
        %847 = vset.pattern.permute.xlu0 0
        %848 = vperm.xlu0 %847, %v695
        %v849 = vpop.permute.xlu0 %848
        %850 = vset.pattern.permute.xlu0 0
        %851 = vperm.xlu0 %850, %v696
        %v852 = vpop.permute.xlu0 %851
        %853 = vset.pattern.permute.xlu0 0
        %854 = vperm.xlu0 %853, %v697
        %v855 = vpop.permute.xlu0 %854
        %856 = vset.pattern.permute.xlu0 0
        %857 = vperm.xlu0 %856, %v698
        %v858 = vpop.permute.xlu0 %857
        %859 = vset.pattern.permute.xlu0 0
        %860 = vperm.xlu0 %859, %v699
        %v861 = vpop.permute.xlu0 %860
        %862 = vset.pattern.permute.xlu0 0
        %863 = vperm.xlu0 %862, %v700
        %v864 = vpop.permute.xlu0 %863
        %865 = vset.pattern.permute.xlu0 0
        %866 = vperm.xlu0 %865, %v701
        %v867 = vpop.permute.xlu0 %866
        %868 = vset.pattern.permute.xlu0 0
        %869 = vperm.xlu0 %868, %v702
        %v870 = vpop.permute.xlu0 %869
        %871 = vset.pattern.permute.xlu0 0
        %872 = vperm.xlu0 %871, %v703
        %v873 = vpop.permute.xlu0 %872
        %874 = vset.pattern.permute.xlu0 0
        %875 = vperm.xlu0 %874, %v704
        %v876 = vpop.permute.xlu0 %875
        %877 = vset.pattern.permute.xlu0 0
        %878 = vperm.xlu0 %877, %v705
        %v879 = vpop.permute.xlu0 %878
        %880 = vset.pattern.permute.xlu0 0
        %881 = vperm.xlu0 %880, %v706
        %v882 = vpop.permute.xlu0 %881
        %883 = vset.pattern.permute.xlu0 0
        %884 = vperm.xlu0 %883, %v707
        %v885 = vpop.permute.xlu0 %884
        %886 = vset.pattern.permute.xlu0 0
        %887 = vperm.xlu0 %886, %v708
        %v888 = vpop.permute.xlu0 %887
        %889 = vset.pattern.permute.xlu0 0
        %890 = vperm.xlu0 %889, %v709
        %v891 = vpop.permute.xlu0 %890
        %892 = vset.pattern.permute.xlu0 0
        %893 = vperm.xlu0 %892, %v710
        %v894 = vpop.permute.xlu0 %893
        %895 = vset.pattern.permute.xlu0 0
        %896 = vperm.xlu0 %895, %v711
        %v897 = vpop.permute.xlu0 %896
        %898 = vset.pattern.permute.xlu0 0
        %899 = vperm.xlu0 %898, %v712
        %v900 = vpop.permute.xlu0 %899
        %901 = vset.pattern.permute.xlu0 0
        %902 = vperm.xlu0 %901, %v713
        %v903 = vpop.permute.xlu0 %902
        %904 = vset.pattern.permute.xlu0 0
        %905 = vperm.xlu0 %904, %v714
        %v906 = vpop.permute.xlu0 %905
        %vm907 = vcmp.eq.s32.totalorder %v717, 1
        %vm908 = vcmp.eq.s32.totalorder %v720, 1
        %vm909 = vcmp.eq.s32.totalorder %v723, 1
        %vm910 = vcmp.eq.s32.totalorder %v726, 1
        %vm911 = vcmp.eq.s32.totalorder %v729, 1
        %vm912 = vcmp.eq.s32.totalorder %v732, 1
        %vm913 = vcmp.eq.s32.totalorder %v735, 1
        %vm914 = vcmp.eq.s32.totalorder %v738, 1
        %vm915 = vcmp.eq.s32.totalorder %v741, 1
        %vm916 = vcmp.eq.s32.totalorder %v744, 1
        %vm917 = vcmp.eq.s32.totalorder %v747, 1
        %vm918 = vcmp.eq.s32.totalorder %v750, 1
        %vm919 = vcmp.eq.s32.totalorder %v753, 1
        %vm920 = vcmp.eq.s32.totalorder %v756, 1
        %vm921 = vcmp.eq.s32.totalorder %v759, 1
        %vm922 = vcmp.eq.s32.totalorder %v762, 1
        %vm923 = vcmp.eq.s32.totalorder %v765, 1
        %vm924 = vcmp.eq.s32.totalorder %v768, 1
        %vm925 = vcmp.eq.s32.totalorder %v771, 1
        %vm926 = vcmp.eq.s32.totalorder %v774, 1
        %vm927 = vcmp.eq.s32.totalorder %v777, 1
        %vm928 = vcmp.eq.s32.totalorder %v780, 1
        %vm929 = vcmp.eq.s32.totalorder %v783, 1
        %vm930 = vcmp.eq.s32.totalorder %v786, 1
        %vm931 = vcmp.eq.s32.totalorder %v789, 1
        %vm932 = vcmp.eq.s32.totalorder %v792, 1
        %vm933 = vcmp.eq.s32.totalorder %v795, 1
        %vm934 = vcmp.eq.s32.totalorder %v798, 1
        %vm935 = vcmp.eq.s32.totalorder %v801, 1
        %vm936 = vcmp.eq.s32.totalorder %v804, 1
        %vm937 = vcmp.eq.s32.totalorder %v807, 1
        %vm938 = vcmp.eq.s32.totalorder %v810, 1
        %vm939 = vcmp.eq.s32.totalorder %v813, 1
        %vm940 = vcmp.eq.s32.totalorder %v816, 1
        %vm941 = vcmp.eq.s32.totalorder %v819, 1
        %vm942 = vcmp.eq.s32.totalorder %v822, 1
        %vm943 = vcmp.eq.s32.totalorder %v825, 1
        %vm944 = vcmp.eq.s32.totalorder %v828, 1
        %vm945 = vcmp.eq.s32.totalorder %v831, 1
        %vm946 = vcmp.eq.s32.totalorder %v834, 1
        %vm947 = vcmp.eq.s32.totalorder %v837, 1
        %vm948 = vcmp.eq.s32.totalorder %v840, 1
        %vm949 = vcmp.eq.s32.totalorder %v843, 1
        %vm950 = vcmp.eq.s32.totalorder %v846, 1
        %vm951 = vcmp.eq.s32.totalorder %v849, 1
        %vm952 = vcmp.eq.s32.totalorder %v852, 1
        %vm953 = vcmp.eq.s32.totalorder %v855, 1
        %vm954 = vcmp.eq.s32.totalorder %v858, 1
        %vm955 = vcmp.eq.s32.totalorder %v861, 1
        %vm956 = vcmp.eq.s32.totalorder %v864, 1
        %vm957 = vcmp.eq.s32.totalorder %v867, 1
        %vm958 = vcmp.eq.s32.totalorder %v870, 1
        %vm959 = vcmp.eq.s32.totalorder %v873, 1
        %vm960 = vcmp.eq.s32.totalorder %v876, 1
        %vm961 = vcmp.eq.s32.totalorder %v879, 1
        %vm962 = vcmp.eq.s32.totalorder %v882, 1
        %vm963 = vcmp.eq.s32.totalorder %v885, 1
        %vm964 = vcmp.eq.s32.totalorder %v888, 1
        %vm965 = vcmp.eq.s32.totalorder %v891, 1
        %vm966 = vcmp.eq.s32.totalorder %v894, 1
        %vm967 = vcmp.eq.s32.totalorder %v897, 1
        %vm968 = vcmp.eq.s32.totalorder %v900, 1
        %vm969 = vcmp.eq.s32.totalorder %v903, 1
        %vm970 = vcmp.eq.s32.totalorder %v906, 1
        %v971 = vsel %vm907, %v200, -inf
        %v972 = vsel %vm908, %v201, -inf
        %v973 = vsel %vm909, %v202, -inf
        %v974 = vsel %vm910, %v203, -inf
        %v975 = vsel %vm911, %v204, -inf
        %v976 = vsel %vm912, %v205, -inf
        %v977 = vsel %vm913, %v206, -inf
        %v978 = vsel %vm914, %v207, -inf
        %v979 = vsel %vm915, %v208, -inf
        %v980 = vsel %vm916, %v209, -inf
        %v981 = vsel %vm917, %v210, -inf
        %v982 = vsel %vm918, %v211, -inf
        %v983 = vsel %vm919, %v212, -inf
        %v984 = vsel %vm920, %v213, -inf
        %v985 = vsel %vm921, %v214, -inf
        %v986 = vsel %vm922, %v215, -inf
        %v987 = vsel %vm923, %v216, -inf
        %v988 = vsel %vm924, %v217, -inf
        %v989 = vsel %vm925, %v218, -inf
        %v990 = vsel %vm926, %v219, -inf
        %v991 = vsel %vm927, %v220, -inf
        %v992 = vsel %vm928, %v221, -inf
        %v993 = vsel %vm929, %v222, -inf
        %v994 = vsel %vm930, %v223, -inf
        %v995 = vsel %vm931, %v224, -inf
        %v996 = vsel %vm932, %v225, -inf
        %v997 = vsel %vm933, %v226, -inf
        %v998 = vsel %vm934, %v227, -inf
        %v999 = vsel %vm935, %v228, -inf
        %v1000 = vsel %vm936, %v229, -inf
        %v1001 = vsel %vm937, %v230, -inf
        %v1002 = vsel %vm938, %v231, -inf
        %v1003 = vsel %vm939, %v232, -inf
        %v1004 = vsel %vm940, %v233, -inf
        %v1005 = vsel %vm941, %v234, -inf
        %v1006 = vsel %vm942, %v235, -inf
        %v1007 = vsel %vm943, %v236, -inf
        %v1008 = vsel %vm944, %v237, -inf
        %v1009 = vsel %vm945, %v238, -inf
        %v1010 = vsel %vm946, %v239, -inf
        %v1011 = vsel %vm947, %v240, -inf
        %v1012 = vsel %vm948, %v241, -inf
        %v1013 = vsel %vm949, %v242, -inf
        %v1014 = vsel %vm950, %v243, -inf
        %v1015 = vsel %vm951, %v244, -inf
        %v1016 = vsel %vm952, %v245, -inf
        %v1017 = vsel %vm953, %v246, -inf
        %v1018 = vsel %vm954, %v247, -inf
        %v1019 = vsel %vm955, %v248, -inf
        %v1020 = vsel %vm956, %v249, -inf
        %v1021 = vsel %vm957, %v250, -inf
        %v1022 = vsel %vm958, %v251, -inf
        %v1023 = vsel %vm959, %v252, -inf
        %v1024 = vsel %vm960, %v253, -inf
        %v1025 = vsel %vm961, %v254, -inf
        %v1026 = vsel %vm962, %v255, -inf
        %v1027 = vsel %vm963, %v256, -inf
        %v1028 = vsel %vm964, %v257, -inf
        %v1029 = vsel %vm965, %v258, -inf
        %v1030 = vsel %vm966, %v259, -inf
        %v1031 = vsel %vm967, %v260, -inf
        %v1032 = vsel %vm968, %v261, -inf
        %v1033 = vsel %vm969, %v262, -inf
        %v1034 = vsel %vm970, %v263, -inf
        %vm1035 = vcmask 523264
        %v1036 = vsel %vm1035, %v971, -inf
        %v1037 = vsel %vm1035, %v972, -inf
        %v1038 = vsel %vm1035, %v973, -inf
        %v1039 = vsel %vm1035, %v974, -inf
        %v1040 = vsel %vm1035, %v975, -inf
        %v1041 = vmax.f32 %v1036, %v1040
        %v1042 = vsel %vm1035, %v976, -inf
        %v1043 = vmax.f32 %v1037, %v1042
        %v1044 = vsel %vm1035, %v977, -inf
        %v1045 = vmax.f32 %v1038, %v1044
        %v1046 = vsel %vm1035, %v978, -inf
        %v1047 = vmax.f32 %v1039, %v1046
        %v1048 = vsel %vm1035, %v979, -inf
        %v1049 = vmax.f32 %v1041, %v1048
        %v1050 = vsel %vm1035, %v980, -inf
        %v1051 = vmax.f32 %v1043, %v1050
        %v1052 = vsel %vm1035, %v981, -inf
        %v1053 = vmax.f32 %v1045, %v1052
        %v1054 = vsel %vm1035, %v982, -inf
        %v1055 = vmax.f32 %v1047, %v1054
        %v1056 = vsel %vm1035, %v983, -inf
        %v1057 = vmax.f32 %v1049, %v1056
        %v1058 = vsel %vm1035, %v984, -inf
        %v1059 = vmax.f32 %v1051, %v1058
        %v1060 = vsel %vm1035, %v985, -inf
        %v1061 = vmax.f32 %v1053, %v1060
        %v1062 = vsel %vm1035, %v986, -inf
        %v1063 = vmax.f32 %v1055, %v1062
        %v1064 = vsel %vm1035, %v987, -inf
        %v1065 = vmax.f32 %v1057, %v1064
        %v1066 = vsel %vm1035, %v988, -inf
        %v1067 = vmax.f32 %v1059, %v1066
        %v1068 = vsel %vm1035, %v989, -inf
        %v1069 = vmax.f32 %v1061, %v1068
        %v1070 = vsel %vm1035, %v990, -inf
        %v1071 = vmax.f32 %v1063, %v1070
        %v1072 = vsel %vm1035, %v991, -inf
        %v1073 = vmax.f32 %v1065, %v1072
        %v1074 = vsel %vm1035, %v992, -inf
        %v1075 = vmax.f32 %v1067, %v1074
        %v1076 = vsel %vm1035, %v993, -inf
        %v1077 = vmax.f32 %v1069, %v1076
        %v1078 = vsel %vm1035, %v994, -inf
        %v1079 = vmax.f32 %v1071, %v1078
        %v1080 = vsel %vm1035, %v995, -inf
        %v1081 = vmax.f32 %v1073, %v1080
        %v1082 = vsel %vm1035, %v996, -inf
        %v1083 = vmax.f32 %v1075, %v1082
        %v1084 = vsel %vm1035, %v997, -inf
        %v1085 = vmax.f32 %v1077, %v1084
        %v1086 = vsel %vm1035, %v998, -inf
        %v1087 = vmax.f32 %v1079, %v1086
        %v1088 = vsel %vm1035, %v999, -inf
        %v1089 = vmax.f32 %v1081, %v1088
        %v1090 = vsel %vm1035, %v1000, -inf
        %v1091 = vmax.f32 %v1083, %v1090
        %v1092 = vsel %vm1035, %v1001, -inf
        %v1093 = vmax.f32 %v1085, %v1092
        %v1094 = vsel %vm1035, %v1002, -inf
        %v1095 = vmax.f32 %v1087, %v1094
        %v1096 = vsel %vm1035, %v1003, -inf
        %v1097 = vmax.f32 %v1089, %v1096
        %v1098 = vsel %vm1035, %v1004, -inf
        %v1099 = vmax.f32 %v1091, %v1098
        %v1100 = vsel %vm1035, %v1005, -inf
        %v1101 = vmax.f32 %v1093, %v1100
        %v1102 = vsel %vm1035, %v1006, -inf
        %v1103 = vmax.f32 %v1095, %v1102
        %v1104 = vsel %vm1035, %v1007, -inf
        %v1105 = vmax.f32 %v1097, %v1104
        %v1106 = vsel %vm1035, %v1008, -inf
        %v1107 = vmax.f32 %v1099, %v1106
        %v1108 = vsel %vm1035, %v1009, -inf
        %v1109 = vmax.f32 %v1101, %v1108
        %v1110 = vsel %vm1035, %v1010, -inf
        %v1111 = vmax.f32 %v1103, %v1110
        %v1112 = vsel %vm1035, %v1011, -inf
        %v1113 = vmax.f32 %v1105, %v1112
        %v1114 = vsel %vm1035, %v1012, -inf
        %v1115 = vmax.f32 %v1107, %v1114
        %v1116 = vsel %vm1035, %v1013, -inf
        %v1117 = vmax.f32 %v1109, %v1116
        %v1118 = vsel %vm1035, %v1014, -inf
        %v1119 = vmax.f32 %v1111, %v1118
        %v1120 = vsel %vm1035, %v1015, -inf
        %v1121 = vmax.f32 %v1113, %v1120
        %v1122 = vsel %vm1035, %v1016, -inf
        %v1123 = vmax.f32 %v1115, %v1122
        %v1124 = vsel %vm1035, %v1017, -inf
        %v1125 = vmax.f32 %v1117, %v1124
        %v1126 = vsel %vm1035, %v1018, -inf
        %v1127 = vmax.f32 %v1119, %v1126
        %v1128 = vsel %vm1035, %v1019, -inf
        %v1129 = vmax.f32 %v1121, %v1128
        %v1130 = vsel %vm1035, %v1020, -inf
        %v1131 = vmax.f32 %v1123, %v1130
        %v1132 = vsel %vm1035, %v1021, -inf
        %v1133 = vmax.f32 %v1125, %v1132
        %v1134 = vsel %vm1035, %v1022, -inf
        %v1135 = vmax.f32 %v1127, %v1134
        %v1136 = vsel %vm1035, %v1023, -inf
        %v1137 = vmax.f32 %v1129, %v1136
        %v1138 = vsel %vm1035, %v1024, -inf
        %v1139 = vmax.f32 %v1131, %v1138
        %v1140 = vsel %vm1035, %v1025, -inf
        %v1141 = vmax.f32 %v1133, %v1140
        %v1142 = vsel %vm1035, %v1026, -inf
        %v1143 = vmax.f32 %v1135, %v1142
        %v1144 = vsel %vm1035, %v1027, -inf
        %v1145 = vmax.f32 %v1137, %v1144
        %v1146 = vsel %vm1035, %v1028, -inf
        %v1147 = vmax.f32 %v1139, %v1146
        %v1148 = vsel %vm1035, %v1029, -inf
        %v1149 = vmax.f32 %v1141, %v1148
        %v1150 = vsel %vm1035, %v1030, -inf
        %v1151 = vmax.f32 %v1143, %v1150
        %v1152 = vsel %vm1035, %v1031, -inf
        %v1153 = vmax.f32 %v1145, %v1152
        %v1154 = vsel %vm1035, %v1032, -inf
        %v1155 = vmax.f32 %v1147, %v1154
        %v1156 = vsel %vm1035, %v1033, -inf
        %v1157 = vmax.f32 %v1149, %v1156
        %v1158 = vsel %vm1035, %v1034, -inf
        %v1159 = vmax.f32 %v1151, %v1158
        %v1160 = vmax.f32 %v1153, %v1155
        %v1161 = vmax.f32 %v1157, %v1159
        %v1162 = vmax.f32 %v1160, %v1161
        %v1163 = vrot.slane %v1162, 4
        %v1164 = vmax.f32 %v1162, %v1163
        %v1165 = vrot.slane %v1164, 2
        %v1166 = vmax.f32 %v1164, %v1165
        %v1167 = vrot.slane %v1166, 1
        %v1168 = vmax.f32 %v1166, %v1167
        %v1169 = vld [vmem:[#allocation2] sm:$0x1]
        %v1170 = vmax.f32 %v1169, %v1168
        %vm1171 = vcmask 516096
        %1172 = vst.msk [vmem:[#allocation2] sm:$0x1] %vm1171, %v1170
        %vm1173 = vcmp.eq.s32.totalorder %v523, 1
        %vm1174 = vcmp.eq.s32.totalorder %v524, 1
        %vm1175 = vcmp.eq.s32.totalorder %v525, 1
        %vm1176 = vcmp.eq.s32.totalorder %v526, 1
        %vm1177 = vcmp.eq.s32.totalorder %v527, 1
        %vm1178 = vcmp.eq.s32.totalorder %v528, 1
        %vm1179 = vcmp.eq.s32.totalorder %v529, 1
        %vm1180 = vcmp.eq.s32.totalorder %v530, 1
        %vm1181 = vcmp.eq.s32.totalorder %v531, 1
        %vm1182 = vcmp.eq.s32.totalorder %v532, 1
        %vm1183 = vcmp.eq.s32.totalorder %v533, 1
        %vm1184 = vcmp.eq.s32.totalorder %v534, 1
        %vm1185 = vcmp.eq.s32.totalorder %v535, 1
        %vm1186 = vcmp.eq.s32.totalorder %v536, 1
        %vm1187 = vcmp.eq.s32.totalorder %v537, 1
        %vm1188 = vcmp.eq.s32.totalorder %v538, 1
        %vm1189 = vcmp.eq.s32.totalorder %v539, 1
        %vm1190 = vcmp.eq.s32.totalorder %v540, 1
        %vm1191 = vcmp.eq.s32.totalorder %v541, 1
        %vm1192 = vcmp.eq.s32.totalorder %v542, 1
        %vm1193 = vcmp.eq.s32.totalorder %v543, 1
        %vm1194 = vcmp.eq.s32.totalorder %v544, 1
        %vm1195 = vcmp.eq.s32.totalorder %v545, 1
        %vm1196 = vcmp.eq.s32.totalorder %v546, 1
        %vm1197 = vcmp.eq.s32.totalorder %v547, 1
        %vm1198 = vcmp.eq.s32.totalorder %v548, 1
        %vm1199 = vcmp.eq.s32.totalorder %v549, 1
        %vm1200 = vcmp.eq.s32.totalorder %v550, 1
        %vm1201 = vcmp.eq.s32.totalorder %v551, 1
        %vm1202 = vcmp.eq.s32.totalorder %v552, 1
        %vm1203 = vcmp.eq.s32.totalorder %v553, 1
        %vm1204 = vcmp.eq.s32.totalorder %v554, 1
        %vm1205 = vcmp.eq.s32.totalorder %v555, 1
        %vm1206 = vcmp.eq.s32.totalorder %v556, 1
        %vm1207 = vcmp.eq.s32.totalorder %v557, 1
        %vm1208 = vcmp.eq.s32.totalorder %v558, 1
        %vm1209 = vcmp.eq.s32.totalorder %v559, 1
        %vm1210 = vcmp.eq.s32.totalorder %v560, 1
        %vm1211 = vcmp.eq.s32.totalorder %v561, 1
        %vm1212 = vcmp.eq.s32.totalorder %v562, 1
        %vm1213 = vcmp.eq.s32.totalorder %v563, 1
        %vm1214 = vcmp.eq.s32.totalorder %v564, 1
        %vm1215 = vcmp.eq.s32.totalorder %v565, 1
        %vm1216 = vcmp.eq.s32.totalorder %v566, 1
        %vm1217 = vcmp.eq.s32.totalorder %v567, 1
        %vm1218 = vcmp.eq.s32.totalorder %v568, 1
        %vm1219 = vcmp.eq.s32.totalorder %v569, 1
        %vm1220 = vcmp.eq.s32.totalorder %v570, 1
        %vm1221 = vcmp.eq.s32.totalorder %v571, 1
        %vm1222 = vcmp.eq.s32.totalorder %v572, 1
        %vm1223 = vcmp.eq.s32.totalorder %v573, 1
        %vm1224 = vcmp.eq.s32.totalorder %v574, 1
        %vm1225 = vcmp.eq.s32.totalorder %v575, 1
        %vm1226 = vcmp.eq.s32.totalorder %v576, 1
        %vm1227 = vcmp.eq.s32.totalorder %v577, 1
        %vm1228 = vcmp.eq.s32.totalorder %v578, 1
        %vm1229 = vcmp.eq.s32.totalorder %v579, 1
        %vm1230 = vcmp.eq.s32.totalorder %v580, 1
        %vm1231 = vcmp.eq.s32.totalorder %v581, 1
        %vm1232 = vcmp.eq.s32.totalorder %v582, 1
        %vm1233 = vcmp.eq.s32.totalorder %v583, 1
        %vm1234 = vcmp.eq.s32.totalorder %v584, 1
        %vm1235 = vcmp.eq.s32.totalorder %v585, 1
        %vm1236 = vcmp.eq.s32.totalorder %v586, 1
        %v1237 = vsel %vm1173, 1, 0
        %v1238 = vsel %vm1174, 1, 0
        %v1239 = vsel %vm1175, 1, 0
        %v1240 = vsel %vm1176, 1, 0
        %v1241 = vsel %vm1177, 1, 0
        %v1242 = vsel %vm1178, 1, 0
        %v1243 = vsel %vm1179, 1, 0
        %v1244 = vsel %vm1180, 1, 0
        %v1245 = vsel %vm1181, 1, 0
        %v1246 = vsel %vm1182, 1, 0
        %v1247 = vsel %vm1183, 1, 0
        %v1248 = vsel %vm1184, 1, 0
        %v1249 = vsel %vm1185, 1, 0
        %v1250 = vsel %vm1186, 1, 0
        %v1251 = vsel %vm1187, 1, 0
        %v1252 = vsel %vm1188, 1, 0
        %v1253 = vsel %vm1189, 1, 0
        %v1254 = vsel %vm1190, 1, 0
        %v1255 = vsel %vm1191, 1, 0
        %v1256 = vsel %vm1192, 1, 0
        %v1257 = vsel %vm1193, 1, 0
        %v1258 = vsel %vm1194, 1, 0
        %v1259 = vsel %vm1195, 1, 0
        %v1260 = vsel %vm1196, 1, 0
        %v1261 = vsel %vm1197, 1, 0
        %v1262 = vsel %vm1198, 1, 0
        %v1263 = vsel %vm1199, 1, 0
        %v1264 = vsel %vm1200, 1, 0
        %v1265 = vsel %vm1201, 1, 0
        %v1266 = vsel %vm1202, 1, 0
        %v1267 = vsel %vm1203, 1, 0
        %v1268 = vsel %vm1204, 1, 0
        %v1269 = vsel %vm1205, 1, 0
        %v1270 = vsel %vm1206, 1, 0
        %v1271 = vsel %vm1207, 1, 0
        %v1272 = vsel %vm1208, 1, 0
        %v1273 = vsel %vm1209, 1, 0
        %v1274 = vsel %vm1210, 1, 0
        %v1275 = vsel %vm1211, 1, 0
        %v1276 = vsel %vm1212, 1, 0
        %v1277 = vsel %vm1213, 1, 0
        %v1278 = vsel %vm1214, 1, 0
        %v1279 = vsel %vm1215, 1, 0
        %v1280 = vsel %vm1216, 1, 0
        %v1281 = vsel %vm1217, 1, 0
        %v1282 = vsel %vm1218, 1, 0
        %v1283 = vsel %vm1219, 1, 0
        %v1284 = vsel %vm1220, 1, 0
        %v1285 = vsel %vm1221, 1, 0
        %v1286 = vsel %vm1222, 1, 0
        %v1287 = vsel %vm1223, 1, 0
        %v1288 = vsel %vm1224, 1, 0
        %v1289 = vsel %vm1225, 1, 0
        %v1290 = vsel %vm1226, 1, 0
        %v1291 = vsel %vm1227, 1, 0
        %v1292 = vsel %vm1228, 1, 0
        %v1293 = vsel %vm1229, 1, 0
        %v1294 = vsel %vm1230, 1, 0
        %v1295 = vsel %vm1231, 1, 0
        %v1296 = vsel %vm1232, 1, 0
        %v1297 = vsel %vm1233, 1, 0
        %v1298 = vsel %vm1234, 1, 0
        %v1299 = vsel %vm1235, 1, 0
        %v1300 = vsel %vm1236, 1, 0
        %1301 = vset.pattern.permute.xlu0 0
        %1302 = vperm.xlu0 %1301, %v1237
        %v1303 = vpop.permute.xlu0 %1302
        %1304 = vset.pattern.permute.xlu0 0
        %1305 = vperm.xlu0 %1304, %v1238
        %v1306 = vpop.permute.xlu0 %1305
        %1307 = vset.pattern.permute.xlu0 0
        %1308 = vperm.xlu0 %1307, %v1239
        %v1309 = vpop.permute.xlu0 %1308
        %1310 = vset.pattern.permute.xlu0 0
        %1311 = vperm.xlu0 %1310, %v1240
        %v1312 = vpop.permute.xlu0 %1311
        %1313 = vset.pattern.permute.xlu0 0
        %1314 = vperm.xlu0 %1313, %v1241
        %v1315 = vpop.permute.xlu0 %1314
        %1316 = vset.pattern.permute.xlu0 0
        %1317 = vperm.xlu0 %1316, %v1242
        %v1318 = vpop.permute.xlu0 %1317
        %1319 = vset.pattern.permute.xlu0 0
        %1320 = vperm.xlu0 %1319, %v1243
        %v1321 = vpop.permute.xlu0 %1320
        %1322 = vset.pattern.permute.xlu0 0
        %1323 = vperm.xlu0 %1322, %v1244
        %v1324 = vpop.permute.xlu0 %1323
        %1325 = vset.pattern.permute.xlu0 0
        %1326 = vperm.xlu0 %1325, %v1245
        %v1327 = vpop.permute.xlu0 %1326
        %1328 = vset.pattern.permute.xlu0 0
        %1329 = vperm.xlu0 %1328, %v1246
        %v1330 = vpop.permute.xlu0 %1329
        %1331 = vset.pattern.permute.xlu0 0
        %1332 = vperm.xlu0 %1331, %v1247
        %v1333 = vpop.permute.xlu0 %1332
        %1334 = vset.pattern.permute.xlu0 0
        %1335 = vperm.xlu0 %1334, %v1248
        %v1336 = vpop.permute.xlu0 %1335
        %1337 = vset.pattern.permute.xlu0 0
        %1338 = vperm.xlu0 %1337, %v1249
        %v1339 = vpop.permute.xlu0 %1338
        %1340 = vset.pattern.permute.xlu0 0
        %1341 = vperm.xlu0 %1340, %v1250
        %v1342 = vpop.permute.xlu0 %1341
        %1343 = vset.pattern.permute.xlu0 0
        %1344 = vperm.xlu0 %1343, %v1251
        %v1345 = vpop.permute.xlu0 %1344
        %1346 = vset.pattern.permute.xlu0 0
        %1347 = vperm.xlu0 %1346, %v1252
        %v1348 = vpop.permute.xlu0 %1347
        %1349 = vset.pattern.permute.xlu0 0
        %1350 = vperm.xlu0 %1349, %v1253
        %v1351 = vpop.permute.xlu0 %1350
        %1352 = vset.pattern.permute.xlu0 0
        %1353 = vperm.xlu0 %1352, %v1254
        %v1354 = vpop.permute.xlu0 %1353
        %1355 = vset.pattern.permute.xlu0 0
        %1356 = vperm.xlu0 %1355, %v1255
        %v1357 = vpop.permute.xlu0 %1356
        %1358 = vset.pattern.permute.xlu0 0
        %1359 = vperm.xlu0 %1358, %v1256
        %v1360 = vpop.permute.xlu0 %1359
        %1361 = vset.pattern.permute.xlu0 0
        %1362 = vperm.xlu0 %1361, %v1257
        %v1363 = vpop.permute.xlu0 %1362
        %1364 = vset.pattern.permute.xlu0 0
        %1365 = vperm.xlu0 %1364, %v1258
        %v1366 = vpop.permute.xlu0 %1365
        %1367 = vset.pattern.permute.xlu0 0
        %1368 = vperm.xlu0 %1367, %v1259
        %v1369 = vpop.permute.xlu0 %1368
        %1370 = vset.pattern.permute.xlu0 0
        %1371 = vperm.xlu0 %1370, %v1260
        %v1372 = vpop.permute.xlu0 %1371
        %1373 = vset.pattern.permute.xlu0 0
        %1374 = vperm.xlu0 %1373, %v1261
        %v1375 = vpop.permute.xlu0 %1374
        %1376 = vset.pattern.permute.xlu0 0
        %1377 = vperm.xlu0 %1376, %v1262
        %v1378 = vpop.permute.xlu0 %1377
        %1379 = vset.pattern.permute.xlu0 0
        %1380 = vperm.xlu0 %1379, %v1263
        %v1381 = vpop.permute.xlu0 %1380
        %1382 = vset.pattern.permute.xlu0 0
        %1383 = vperm.xlu0 %1382, %v1264
        %v1384 = vpop.permute.xlu0 %1383
        %1385 = vset.pattern.permute.xlu0 0
        %1386 = vperm.xlu0 %1385, %v1265
        %v1387 = vpop.permute.xlu0 %1386
        %1388 = vset.pattern.permute.xlu0 0
        %1389 = vperm.xlu0 %1388, %v1266
        %v1390 = vpop.permute.xlu0 %1389
        %1391 = vset.pattern.permute.xlu0 0
        %1392 = vperm.xlu0 %1391, %v1267
        %v1393 = vpop.permute.xlu0 %1392
        %1394 = vset.pattern.permute.xlu0 0
        %1395 = vperm.xlu0 %1394, %v1268
        %v1396 = vpop.permute.xlu0 %1395
        %1397 = vset.pattern.permute.xlu0 0
        %1398 = vperm.xlu0 %1397, %v1269
        %v1399 = vpop.permute.xlu0 %1398
        %1400 = vset.pattern.permute.xlu0 0
        %1401 = vperm.xlu0 %1400, %v1270
        %v1402 = vpop.permute.xlu0 %1401
        %1403 = vset.pattern.permute.xlu0 0
        %1404 = vperm.xlu0 %1403, %v1271
        %v1405 = vpop.permute.xlu0 %1404
        %1406 = vset.pattern.permute.xlu0 0
        %1407 = vperm.xlu0 %1406, %v1272
        %v1408 = vpop.permute.xlu0 %1407
        %1409 = vset.pattern.permute.xlu0 0
        %1410 = vperm.xlu0 %1409, %v1273
        %v1411 = vpop.permute.xlu0 %1410
        %1412 = vset.pattern.permute.xlu0 0
        %1413 = vperm.xlu0 %1412, %v1274
        %v1414 = vpop.permute.xlu0 %1413
        %1415 = vset.pattern.permute.xlu0 0
        %1416 = vperm.xlu0 %1415, %v1275
        %v1417 = vpop.permute.xlu0 %1416
        %1418 = vset.pattern.permute.xlu0 0
        %1419 = vperm.xlu0 %1418, %v1276
        %v1420 = vpop.permute.xlu0 %1419
        %1421 = vset.pattern.permute.xlu0 0
        %1422 = vperm.xlu0 %1421, %v1277
        %v1423 = vpop.permute.xlu0 %1422
        %1424 = vset.pattern.permute.xlu0 0
        %1425 = vperm.xlu0 %1424, %v1278
        %v1426 = vpop.permute.xlu0 %1425
        %1427 = vset.pattern.permute.xlu0 0
        %1428 = vperm.xlu0 %1427, %v1279
        %v1429 = vpop.permute.xlu0 %1428
        %1430 = vset.pattern.permute.xlu0 0
        %1431 = vperm.xlu0 %1430, %v1280
        %v1432 = vpop.permute.xlu0 %1431
        %1433 = vset.pattern.permute.xlu0 0
        %1434 = vperm.xlu0 %1433, %v1281
        %v1435 = vpop.permute.xlu0 %1434
        %1436 = vset.pattern.permute.xlu0 0
        %1437 = vperm.xlu0 %1436, %v1282
        %v1438 = vpop.permute.xlu0 %1437
        %1439 = vset.pattern.permute.xlu0 0
        %1440 = vperm.xlu0 %1439, %v1283
        %v1441 = vpop.permute.xlu0 %1440
        %1442 = vset.pattern.permute.xlu0 0
        %1443 = vperm.xlu0 %1442, %v1284
        %v1444 = vpop.permute.xlu0 %1443
        %1445 = vset.pattern.permute.xlu0 0
        %1446 = vperm.xlu0 %1445, %v1285
        %v1447 = vpop.permute.xlu0 %1446
        %1448 = vset.pattern.permute.xlu0 0
        %1449 = vperm.xlu0 %1448, %v1286
        %v1450 = vpop.permute.xlu0 %1449
        %1451 = vset.pattern.permute.xlu0 0
        %1452 = vperm.xlu0 %1451, %v1287
        %v1453 = vpop.permute.xlu0 %1452
        %1454 = vset.pattern.permute.xlu0 0
        %1455 = vperm.xlu0 %1454, %v1288
        %v1456 = vpop.permute.xlu0 %1455
        %1457 = vset.pattern.permute.xlu0 0
        %1458 = vperm.xlu0 %1457, %v1289
        %v1459 = vpop.permute.xlu0 %1458
        %1460 = vset.pattern.permute.xlu0 0
        %1461 = vperm.xlu0 %1460, %v1290
        %v1462 = vpop.permute.xlu0 %1461
        %1463 = vset.pattern.permute.xlu0 0
        %1464 = vperm.xlu0 %1463, %v1291
        %v1465 = vpop.permute.xlu0 %1464
        %1466 = vset.pattern.permute.xlu0 0
        %1467 = vperm.xlu0 %1466, %v1292
        %v1468 = vpop.permute.xlu0 %1467
        %1469 = vset.pattern.permute.xlu0 0
        %1470 = vperm.xlu0 %1469, %v1293
        %v1471 = vpop.permute.xlu0 %1470
        %1472 = vset.pattern.permute.xlu0 0
        %1473 = vperm.xlu0 %1472, %v1294
        %v1474 = vpop.permute.xlu0 %1473
        %1475 = vset.pattern.permute.xlu0 0
        %1476 = vperm.xlu0 %1475, %v1295
        %v1477 = vpop.permute.xlu0 %1476
        %1478 = vset.pattern.permute.xlu0 0
        %1479 = vperm.xlu0 %1478, %v1296
        %v1480 = vpop.permute.xlu0 %1479
        %1481 = vset.pattern.permute.xlu0 0
        %1482 = vperm.xlu0 %1481, %v1297
        %v1483 = vpop.permute.xlu0 %1482
        %1484 = vset.pattern.permute.xlu0 0
        %1485 = vperm.xlu0 %1484, %v1298
        %v1486 = vpop.permute.xlu0 %1485
        %1487 = vset.pattern.permute.xlu0 0
        %1488 = vperm.xlu0 %1487, %v1299
        %v1489 = vpop.permute.xlu0 %1488
        %1490 = vset.pattern.permute.xlu0 0
        %1491 = vperm.xlu0 %1490, %v1300
        %v1492 = vpop.permute.xlu0 %1491
        %vm1493 = vcmp.eq.s32.totalorder %v1303, 1
        %vm1494 = vcmp.eq.s32.totalorder %v1306, 1
        %vm1495 = vcmp.eq.s32.totalorder %v1309, 1
        %vm1496 = vcmp.eq.s32.totalorder %v1312, 1
        %vm1497 = vcmp.eq.s32.totalorder %v1315, 1
        %vm1498 = vcmp.eq.s32.totalorder %v1318, 1
        %vm1499 = vcmp.eq.s32.totalorder %v1321, 1
        %vm1500 = vcmp.eq.s32.totalorder %v1324, 1
        %vm1501 = vcmp.eq.s32.totalorder %v1327, 1
        %vm1502 = vcmp.eq.s32.totalorder %v1330, 1
        %vm1503 = vcmp.eq.s32.totalorder %v1333, 1
        %vm1504 = vcmp.eq.s32.totalorder %v1336, 1
        %vm1505 = vcmp.eq.s32.totalorder %v1339, 1
        %vm1506 = vcmp.eq.s32.totalorder %v1342, 1
        %vm1507 = vcmp.eq.s32.totalorder %v1345, 1
        %vm1508 = vcmp.eq.s32.totalorder %v1348, 1
        %vm1509 = vcmp.eq.s32.totalorder %v1351, 1
        %vm1510 = vcmp.eq.s32.totalorder %v1354, 1
        %vm1511 = vcmp.eq.s32.totalorder %v1357, 1
        %vm1512 = vcmp.eq.s32.totalorder %v1360, 1
        %vm1513 = vcmp.eq.s32.totalorder %v1363, 1
        %vm1514 = vcmp.eq.s32.totalorder %v1366, 1
        %vm1515 = vcmp.eq.s32.totalorder %v1369, 1
        %vm1516 = vcmp.eq.s32.totalorder %v1372, 1
        %vm1517 = vcmp.eq.s32.totalorder %v1375, 1
        %vm1518 = vcmp.eq.s32.totalorder %v1378, 1
        %vm1519 = vcmp.eq.s32.totalorder %v1381, 1
        %vm1520 = vcmp.eq.s32.totalorder %v1384, 1
        %vm1521 = vcmp.eq.s32.totalorder %v1387, 1
        %vm1522 = vcmp.eq.s32.totalorder %v1390, 1
        %vm1523 = vcmp.eq.s32.totalorder %v1393, 1
        %vm1524 = vcmp.eq.s32.totalorder %v1396, 1
        %vm1525 = vcmp.eq.s32.totalorder %v1399, 1
        %vm1526 = vcmp.eq.s32.totalorder %v1402, 1
        %vm1527 = vcmp.eq.s32.totalorder %v1405, 1
        %vm1528 = vcmp.eq.s32.totalorder %v1408, 1
        %vm1529 = vcmp.eq.s32.totalorder %v1411, 1
        %vm1530 = vcmp.eq.s32.totalorder %v1414, 1
        %vm1531 = vcmp.eq.s32.totalorder %v1417, 1
        %vm1532 = vcmp.eq.s32.totalorder %v1420, 1
        %vm1533 = vcmp.eq.s32.totalorder %v1423, 1
        %vm1534 = vcmp.eq.s32.totalorder %v1426, 1
        %vm1535 = vcmp.eq.s32.totalorder %v1429, 1
        %vm1536 = vcmp.eq.s32.totalorder %v1432, 1
        %vm1537 = vcmp.eq.s32.totalorder %v1435, 1
        %vm1538 = vcmp.eq.s32.totalorder %v1438, 1
        %vm1539 = vcmp.eq.s32.totalorder %v1441, 1
        %vm1540 = vcmp.eq.s32.totalorder %v1444, 1
        %vm1541 = vcmp.eq.s32.totalorder %v1447, 1
        %vm1542 = vcmp.eq.s32.totalorder %v1450, 1
        %vm1543 = vcmp.eq.s32.totalorder %v1453, 1
        %vm1544 = vcmp.eq.s32.totalorder %v1456, 1
        %vm1545 = vcmp.eq.s32.totalorder %v1459, 1
        %vm1546 = vcmp.eq.s32.totalorder %v1462, 1
        %vm1547 = vcmp.eq.s32.totalorder %v1465, 1
        %vm1548 = vcmp.eq.s32.totalorder %v1468, 1
        %vm1549 = vcmp.eq.s32.totalorder %v1471, 1
        %vm1550 = vcmp.eq.s32.totalorder %v1474, 1
        %vm1551 = vcmp.eq.s32.totalorder %v1477, 1
        %vm1552 = vcmp.eq.s32.totalorder %v1480, 1
        %vm1553 = vcmp.eq.s32.totalorder %v1483, 1
        %vm1554 = vcmp.eq.s32.totalorder %v1486, 1
        %vm1555 = vcmp.eq.s32.totalorder %v1489, 1
        %vm1556 = vcmp.eq.s32.totalorder %v1492, 1
        %v1557 = vsel %vm1493, %v200, -inf
        %v1558 = vsel %vm1494, %v201, -inf
        %v1559 = vsel %vm1495, %v202, -inf
        %v1560 = vsel %vm1496, %v203, -inf
        %v1561 = vsel %vm1497, %v204, -inf
        %v1562 = vsel %vm1498, %v205, -inf
        %v1563 = vsel %vm1499, %v206, -inf
        %v1564 = vsel %vm1500, %v207, -inf
        %v1565 = vsel %vm1501, %v208, -inf
        %v1566 = vsel %vm1502, %v209, -inf
        %v1567 = vsel %vm1503, %v210, -inf
        %v1568 = vsel %vm1504, %v211, -inf
        %v1569 = vsel %vm1505, %v212, -inf
        %v1570 = vsel %vm1506, %v213, -inf
        %v1571 = vsel %vm1507, %v214, -inf
        %v1572 = vsel %vm1508, %v215, -inf
        %v1573 = vsel %vm1509, %v216, -inf
        %v1574 = vsel %vm1510, %v217, -inf
        %v1575 = vsel %vm1511, %v218, -inf
        %v1576 = vsel %vm1512, %v219, -inf
        %v1577 = vsel %vm1513, %v220, -inf
        %v1578 = vsel %vm1514, %v221, -inf
        %v1579 = vsel %vm1515, %v222, -inf
        %v1580 = vsel %vm1516, %v223, -inf
        %v1581 = vsel %vm1517, %v224, -inf
        %v1582 = vsel %vm1518, %v225, -inf
        %v1583 = vsel %vm1519, %v226, -inf
        %v1584 = vsel %vm1520, %v227, -inf
        %v1585 = vsel %vm1521, %v228, -inf
        %v1586 = vsel %vm1522, %v229, -inf
        %v1587 = vsel %vm1523, %v230, -inf
        %v1588 = vsel %vm1524, %v231, -inf
        %v1589 = vsel %vm1525, %v232, -inf
        %v1590 = vsel %vm1526, %v233, -inf
        %v1591 = vsel %vm1527, %v234, -inf
        %v1592 = vsel %vm1528, %v235, -inf
        %v1593 = vsel %vm1529, %v236, -inf
        %v1594 = vsel %vm1530, %v237, -inf
        %v1595 = vsel %vm1531, %v238, -inf
        %v1596 = vsel %vm1532, %v239, -inf
        %v1597 = vsel %vm1533, %v240, -inf
        %v1598 = vsel %vm1534, %v241, -inf
        %v1599 = vsel %vm1535, %v242, -inf
        %v1600 = vsel %vm1536, %v243, -inf
        %v1601 = vsel %vm1537, %v244, -inf
        %v1602 = vsel %vm1538, %v245, -inf
        %v1603 = vsel %vm1539, %v246, -inf
        %v1604 = vsel %vm1540, %v247, -inf
        %v1605 = vsel %vm1541, %v248, -inf
        %v1606 = vsel %vm1542, %v249, -inf
        %v1607 = vsel %vm1543, %v250, -inf
        %v1608 = vsel %vm1544, %v251, -inf
        %v1609 = vsel %vm1545, %v252, -inf
        %v1610 = vsel %vm1546, %v253, -inf
        %v1611 = vsel %vm1547, %v254, -inf
        %v1612 = vsel %vm1548, %v255, -inf
        %v1613 = vsel %vm1549, %v256, -inf
        %v1614 = vsel %vm1550, %v257, -inf
        %v1615 = vsel %vm1551, %v258, -inf
        %v1616 = vsel %vm1552, %v259, -inf
        %v1617 = vsel %vm1553, %v260, -inf
        %v1618 = vsel %vm1554, %v261, -inf
        %v1619 = vsel %vm1555, %v262, -inf
        %v1620 = vsel %vm1556, %v263, -inf
        %v1621 = vsel %vm1035, %v1557, -inf
        %v1622 = vsel %vm1035, %v1558, -inf
        %v1623 = vsel %vm1035, %v1559, -inf
        %v1624 = vsel %vm1035, %v1560, -inf
        %v1625 = vsel %vm1035, %v1561, -inf
        %v1626 = vmax.f32 %v1621, %v1625
        %v1627 = vsel %vm1035, %v1562, -inf
        %v1628 = vmax.f32 %v1622, %v1627
        %v1629 = vsel %vm1035, %v1563, -inf
        %v1630 = vmax.f32 %v1623, %v1629
        %v1631 = vsel %vm1035, %v1564, -inf
        %v1632 = vmax.f32 %v1624, %v1631
        %v1633 = vsel %vm1035, %v1565, -inf
        %v1634 = vmax.f32 %v1626, %v1633
        %v1635 = vsel %vm1035, %v1566, -inf
        %v1636 = vmax.f32 %v1628, %v1635
        %v1637 = vsel %vm1035, %v1567, -inf
        %v1638 = vmax.f32 %v1630, %v1637
        %v1639 = vsel %vm1035, %v1568, -inf
        %v1640 = vmax.f32 %v1632, %v1639
        %v1641 = vsel %vm1035, %v1569, -inf
        %v1642 = vmax.f32 %v1634, %v1641
        %v1643 = vsel %vm1035, %v1570, -inf
        %v1644 = vmax.f32 %v1636, %v1643
        %v1645 = vsel %vm1035, %v1571, -inf
        %v1646 = vmax.f32 %v1638, %v1645
        %v1647 = vsel %vm1035, %v1572, -inf
        %v1648 = vmax.f32 %v1640, %v1647
        %v1649 = vsel %vm1035, %v1573, -inf
        %v1650 = vmax.f32 %v1642, %v1649
        %v1651 = vsel %vm1035, %v1574, -inf
        %v1652 = vmax.f32 %v1644, %v1651
        %v1653 = vsel %vm1035, %v1575, -inf
        %v1654 = vmax.f32 %v1646, %v1653
        %v1655 = vsel %vm1035, %v1576, -inf
        %v1656 = vmax.f32 %v1648, %v1655
        %v1657 = vsel %vm1035, %v1577, -inf
        %v1658 = vmax.f32 %v1650, %v1657
        %v1659 = vsel %vm1035, %v1578, -inf
        %v1660 = vmax.f32 %v1652, %v1659
        %v1661 = vsel %vm1035, %v1579, -inf
        %v1662 = vmax.f32 %v1654, %v1661
        %v1663 = vsel %vm1035, %v1580, -inf
        %v1664 = vmax.f32 %v1656, %v1663
        %v1665 = vsel %vm1035, %v1581, -inf
        %v1666 = vmax.f32 %v1658, %v1665
        %v1667 = vsel %vm1035, %v1582, -inf
        %v1668 = vmax.f32 %v1660, %v1667
        %v1669 = vsel %vm1035, %v1583, -inf
        %v1670 = vmax.f32 %v1662, %v1669
        %v1671 = vsel %vm1035, %v1584, -inf
        %v1672 = vmax.f32 %v1664, %v1671
        %v1673 = vsel %vm1035, %v1585, -inf
        %v1674 = vmax.f32 %v1666, %v1673
        %v1675 = vsel %vm1035, %v1586, -inf
        %v1676 = vmax.f32 %v1668, %v1675
        %v1677 = vsel %vm1035, %v1587, -inf
        %v1678 = vmax.f32 %v1670, %v1677
        %v1679 = vsel %vm1035, %v1588, -inf
        %v1680 = vmax.f32 %v1672, %v1679
        %v1681 = vsel %vm1035, %v1589, -inf
        %v1682 = vmax.f32 %v1674, %v1681
        %v1683 = vsel %vm1035, %v1590, -inf
        %v1684 = vmax.f32 %v1676, %v1683
        %v1685 = vsel %vm1035, %v1591, -inf
        %v1686 = vmax.f32 %v1678, %v1685
        %v1687 = vsel %vm1035, %v1592, -inf
        %v1688 = vmax.f32 %v1680, %v1687
        %v1689 = vsel %vm1035, %v1593, -inf
        %v1690 = vmax.f32 %v1682, %v1689
        %v1691 = vsel %vm1035, %v1594, -inf
        %v1692 = vmax.f32 %v1684, %v1691
        %v1693 = vsel %vm1035, %v1595, -inf
        %v1694 = vmax.f32 %v1686, %v1693
        %v1695 = vsel %vm1035, %v1596, -inf
        %v1696 = vmax.f32 %v1688, %v1695
        %v1697 = vsel %vm1035, %v1597, -inf
        %v1698 = vmax.f32 %v1690, %v1697
        %v1699 = vsel %vm1035, %v1598, -inf
        %v1700 = vmax.f32 %v1692, %v1699
        %v1701 = vsel %vm1035, %v1599, -inf
        %v1702 = vmax.f32 %v1694, %v1701
        %v1703 = vsel %vm1035, %v1600, -inf
        %v1704 = vmax.f32 %v1696, %v1703
        %v1705 = vsel %vm1035, %v1601, -inf
        %v1706 = vmax.f32 %v1698, %v1705
        %v1707 = vsel %vm1035, %v1602, -inf
        %v1708 = vmax.f32 %v1700, %v1707
        %v1709 = vsel %vm1035, %v1603, -inf
        %v1710 = vmax.f32 %v1702, %v1709
        %v1711 = vsel %vm1035, %v1604, -inf
        %v1712 = vmax.f32 %v1704, %v1711
        %v1713 = vsel %vm1035, %v1605, -inf
        %v1714 = vmax.f32 %v1706, %v1713
        %v1715 = vsel %vm1035, %v1606, -inf
        %v1716 = vmax.f32 %v1708, %v1715
        %v1717 = vsel %vm1035, %v1607, -inf
        %v1718 = vmax.f32 %v1710, %v1717
        %v1719 = vsel %vm1035, %v1608, -inf
        %v1720 = vmax.f32 %v1712, %v1719
        %v1721 = vsel %vm1035, %v1609, -inf
        %v1722 = vmax.f32 %v1714, %v1721
        %v1723 = vsel %vm1035, %v1610, -inf
        %v1724 = vmax.f32 %v1716, %v1723
        %v1725 = vsel %vm1035, %v1611, -inf
        %v1726 = vmax.f32 %v1718, %v1725
        %v1727 = vsel %vm1035, %v1612, -inf
        %v1728 = vmax.f32 %v1720, %v1727
        %v1729 = vsel %vm1035, %v1613, -inf
        %v1730 = vmax.f32 %v1722, %v1729
        %v1731 = vsel %vm1035, %v1614, -inf
        %v1732 = vmax.f32 %v1724, %v1731
        %v1733 = vsel %vm1035, %v1615, -inf
        %v1734 = vmax.f32 %v1726, %v1733
        %v1735 = vsel %vm1035, %v1616, -inf
        %v1736 = vmax.f32 %v1728, %v1735
        %v1737 = vsel %vm1035, %v1617, -inf
        %v1738 = vmax.f32 %v1730, %v1737
        %v1739 = vsel %vm1035, %v1618, -inf
        %v1740 = vmax.f32 %v1732, %v1739
        %v1741 = vsel %vm1035, %v1619, -inf
        %v1742 = vmax.f32 %v1734, %v1741
        %v1743 = vsel %vm1035, %v1620, -inf
        %v1744 = vmax.f32 %v1736, %v1743
        %v1745 = vmax.f32 %v1738, %v1740
        %v1746 = vmax.f32 %v1742, %v1744
        %v1747 = vmax.f32 %v1745, %v1746
        %v1748 = vrot.slane %v1747, 4
        %v1749 = vmax.f32 %v1747, %v1748
        %v1750 = vrot.slane %v1749, 2
        %v1751 = vmax.f32 %v1749, %v1750
        %v1752 = vrot.slane %v1751, 1
        %v1753 = vmax.f32 %v1751, %v1752
        %v1754 = vld [vmem:[#allocation2 + $0x1] sm:$0x1]
        %v1755 = vmax.f32 %v1754, %v1753
        %1756 = vst.msk [vmem:[#allocation2 + $0x1] sm:$0x1] %vm1171, %v1755
        %vm1757 = vcmp.eq.s32.totalorder %v523, 2
        %vm1758 = vcmp.eq.s32.totalorder %v524, 2
        %vm1759 = vcmp.eq.s32.totalorder %v525, 2
        %vm1760 = vcmp.eq.s32.totalorder %v526, 2
        %vm1761 = vcmp.eq.s32.totalorder %v527, 2
        %vm1762 = vcmp.eq.s32.totalorder %v528, 2
        %vm1763 = vcmp.eq.s32.totalorder %v529, 2
        %vm1764 = vcmp.eq.s32.totalorder %v530, 2
        %vm1765 = vcmp.eq.s32.totalorder %v531, 2
        %vm1766 = vcmp.eq.s32.totalorder %v532, 2
        %vm1767 = vcmp.eq.s32.totalorder %v533, 2
        %vm1768 = vcmp.eq.s32.totalorder %v534, 2
        %vm1769 = vcmp.eq.s32.totalorder %v535, 2
        %vm1770 = vcmp.eq.s32.totalorder %v536, 2
        %vm1771 = vcmp.eq.s32.totalorder %v537, 2
        %vm1772 = vcmp.eq.s32.totalorder %v538, 2
        %vm1773 = vcmp.eq.s32.totalorder %v539, 2
        %vm1774 = vcmp.eq.s32.totalorder %v540, 2
        %vm1775 = vcmp.eq.s32.totalorder %v541, 2
        %vm1776 = vcmp.eq.s32.totalorder %v542, 2
        %vm1777 = vcmp.eq.s32.totalorder %v543, 2
        %vm1778 = vcmp.eq.s32.totalorder %v544, 2
        %vm1779 = vcmp.eq.s32.totalorder %v545, 2
        %vm1780 = vcmp.eq.s32.totalorder %v546, 2
        %vm1781 = vcmp.eq.s32.totalorder %v547, 2
        %vm1782 = vcmp.eq.s32.totalorder %v548, 2
        %vm1783 = vcmp.eq.s32.totalorder %v549, 2
        %vm1784 = vcmp.eq.s32.totalorder %v550, 2
        %vm1785 = vcmp.eq.s32.totalorder %v551, 2
        %vm1786 = vcmp.eq.s32.totalorder %v552, 2
        %vm1787 = vcmp.eq.s32.totalorder %v553, 2
        %vm1788 = vcmp.eq.s32.totalorder %v554, 2
        %vm1789 = vcmp.eq.s32.totalorder %v555, 2
        %vm1790 = vcmp.eq.s32.totalorder %v556, 2
        %vm1791 = vcmp.eq.s32.totalorder %v557, 2
        %vm1792 = vcmp.eq.s32.totalorder %v558, 2
        %vm1793 = vcmp.eq.s32.totalorder %v559, 2
        %vm1794 = vcmp.eq.s32.totalorder %v560, 2
        %vm1795 = vcmp.eq.s32.totalorder %v561, 2
        %vm1796 = vcmp.eq.s32.totalorder %v562, 2
        %vm1797 = vcmp.eq.s32.totalorder %v563, 2
        %vm1798 = vcmp.eq.s32.totalorder %v564, 2
        %vm1799 = vcmp.eq.s32.totalorder %v565, 2
        %vm1800 = vcmp.eq.s32.totalorder %v566, 2
        %vm1801 = vcmp.eq.s32.totalorder %v567, 2
        %vm1802 = vcmp.eq.s32.totalorder %v568, 2
        %vm1803 = vcmp.eq.s32.totalorder %v569, 2
        %vm1804 = vcmp.eq.s32.totalorder %v570, 2
        %vm1805 = vcmp.eq.s32.totalorder %v571, 2
        %vm1806 = vcmp.eq.s32.totalorder %v572, 2
        %vm1807 = vcmp.eq.s32.totalorder %v573, 2
        %vm1808 = vcmp.eq.s32.totalorder %v574, 2
        %vm1809 = vcmp.eq.s32.totalorder %v575, 2
        %vm1810 = vcmp.eq.s32.totalorder %v576, 2
        %vm1811 = vcmp.eq.s32.totalorder %v577, 2
        %vm1812 = vcmp.eq.s32.totalorder %v578, 2
        %vm1813 = vcmp.eq.s32.totalorder %v579, 2
        %vm1814 = vcmp.eq.s32.totalorder %v580, 2
        %vm1815 = vcmp.eq.s32.totalorder %v581, 2
        %vm1816 = vcmp.eq.s32.totalorder %v582, 2
        %vm1817 = vcmp.eq.s32.totalorder %v583, 2
        %vm1818 = vcmp.eq.s32.totalorder %v584, 2
        %vm1819 = vcmp.eq.s32.totalorder %v585, 2
        %vm1820 = vcmp.eq.s32.totalorder %v586, 2
        %v1821 = vsel %vm1757, 1, 0
        %v1822 = vsel %vm1758, 1, 0
        %v1823 = vsel %vm1759, 1, 0
        %v1824 = vsel %vm1760, 1, 0
        %v1825 = vsel %vm1761, 1, 0
        %v1826 = vsel %vm1762, 1, 0
        %v1827 = vsel %vm1763, 1, 0
        %v1828 = vsel %vm1764, 1, 0
        %v1829 = vsel %vm1765, 1, 0
        %v1830 = vsel %vm1766, 1, 0
        %v1831 = vsel %vm1767, 1, 0
        %v1832 = vsel %vm1768, 1, 0
        %v1833 = vsel %vm1769, 1, 0
        %v1834 = vsel %vm1770, 1, 0
        %v1835 = vsel %vm1771, 1, 0
        %v1836 = vsel %vm1772, 1, 0
        %v1837 = vsel %vm1773, 1, 0
        %v1838 = vsel %vm1774, 1, 0
        %v1839 = vsel %vm1775, 1, 0
        %v1840 = vsel %vm1776, 1, 0
        %v1841 = vsel %vm1777, 1, 0
        %v1842 = vsel %vm1778, 1, 0
        %v1843 = vsel %vm1779, 1, 0
        %v1844 = vsel %vm1780, 1, 0
        %v1845 = vsel %vm1781, 1, 0
        %v1846 = vsel %vm1782, 1, 0
        %v1847 = vsel %vm1783, 1, 0
        %v1848 = vsel %vm1784, 1, 0
        %v1849 = vsel %vm1785, 1, 0
        %v1850 = vsel %vm1786, 1, 0
        %v1851 = vsel %vm1787, 1, 0
        %v1852 = vsel %vm1788, 1, 0
        %v1853 = vsel %vm1789, 1, 0
        %v1854 = vsel %vm1790, 1, 0
        %v1855 = vsel %vm1791, 1, 0
        %v1856 = vsel %vm1792, 1, 0
        %v1857 = vsel %vm1793, 1, 0
        %v1858 = vsel %vm1794, 1, 0
        %v1859 = vsel %vm1795, 1, 0
        %v1860 = vsel %vm1796, 1, 0
        %v1861 = vsel %vm1797, 1, 0
        %v1862 = vsel %vm1798, 1, 0
        %v1863 = vsel %vm1799, 1, 0
        %v1864 = vsel %vm1800, 1, 0
        %v1865 = vsel %vm1801, 1, 0
        %v1866 = vsel %vm1802, 1, 0
        %v1867 = vsel %vm1803, 1, 0
        %v1868 = vsel %vm1804, 1, 0
        %v1869 = vsel %vm1805, 1, 0
        %v1870 = vsel %vm1806, 1, 0
        %v1871 = vsel %vm1807, 1, 0
        %v1872 = vsel %vm1808, 1, 0
        %v1873 = vsel %vm1809, 1, 0
        %v1874 = vsel %vm1810, 1, 0
        %v1875 = vsel %vm1811, 1, 0
        %v1876 = vsel %vm1812, 1, 0
        %v1877 = vsel %vm1813, 1, 0
        %v1878 = vsel %vm1814, 1, 0
        %v1879 = vsel %vm1815, 1, 0
        %v1880 = vsel %vm1816, 1, 0
        %v1881 = vsel %vm1817, 1, 0
        %v1882 = vsel %vm1818, 1, 0
        %v1883 = vsel %vm1819, 1, 0
        %v1884 = vsel %vm1820, 1, 0
        %1885 = vset.pattern.permute.xlu0 0
        %1886 = vperm.xlu0 %1885, %v1821
        %v1887 = vpop.permute.xlu0 %1886
        %1888 = vset.pattern.permute.xlu0 0
        %1889 = vperm.xlu0 %1888, %v1822
        %v1890 = vpop.permute.xlu0 %1889
        %1891 = vset.pattern.permute.xlu0 0
        %1892 = vperm.xlu0 %1891, %v1823
        %v1893 = vpop.permute.xlu0 %1892
        %1894 = vset.pattern.permute.xlu0 0
        %1895 = vperm.xlu0 %1894, %v1824
        %v1896 = vpop.permute.xlu0 %1895
        %1897 = vset.pattern.permute.xlu0 0
        %1898 = vperm.xlu0 %1897, %v1825
        %v1899 = vpop.permute.xlu0 %1898
        %1900 = vset.pattern.permute.xlu0 0
        %1901 = vperm.xlu0 %1900, %v1826
        %v1902 = vpop.permute.xlu0 %1901
        %1903 = vset.pattern.permute.xlu0 0
        %1904 = vperm.xlu0 %1903, %v1827
        %v1905 = vpop.permute.xlu0 %1904
        %1906 = vset.pattern.permute.xlu0 0
        %1907 = vperm.xlu0 %1906, %v1828
        %v1908 = vpop.permute.xlu0 %1907
        %1909 = vset.pattern.permute.xlu0 0
        %1910 = vperm.xlu0 %1909, %v1829
        %v1911 = vpop.permute.xlu0 %1910
        %1912 = vset.pattern.permute.xlu0 0
        %1913 = vperm.xlu0 %1912, %v1830
        %v1914 = vpop.permute.xlu0 %1913
        %1915 = vset.pattern.permute.xlu0 0
        %1916 = vperm.xlu0 %1915, %v1831
        %v1917 = vpop.permute.xlu0 %1916
        %1918 = vset.pattern.permute.xlu0 0
        %1919 = vperm.xlu0 %1918, %v1832
        %v1920 = vpop.permute.xlu0 %1919
        %1921 = vset.pattern.permute.xlu0 0
        %1922 = vperm.xlu0 %1921, %v1833
        %v1923 = vpop.permute.xlu0 %1922
        %1924 = vset.pattern.permute.xlu0 0
        %1925 = vperm.xlu0 %1924, %v1834
        %v1926 = vpop.permute.xlu0 %1925
        %1927 = vset.pattern.permute.xlu0 0
        %1928 = vperm.xlu0 %1927, %v1835
        %v1929 = vpop.permute.xlu0 %1928
        %1930 = vset.pattern.permute.xlu0 0
        %1931 = vperm.xlu0 %1930, %v1836
        %v1932 = vpop.permute.xlu0 %1931
        %1933 = vset.pattern.permute.xlu0 0
        %1934 = vperm.xlu0 %1933, %v1837
        %v1935 = vpop.permute.xlu0 %1934
        %1936 = vset.pattern.permute.xlu0 0
        %1937 = vperm.xlu0 %1936, %v1838
        %v1938 = vpop.permute.xlu0 %1937
        %1939 = vset.pattern.permute.xlu0 0
        %1940 = vperm.xlu0 %1939, %v1839
        %v1941 = vpop.permute.xlu0 %1940
        %1942 = vset.pattern.permute.xlu0 0
        %1943 = vperm.xlu0 %1942, %v1840
        %v1944 = vpop.permute.xlu0 %1943
        %1945 = vset.pattern.permute.xlu0 0
        %1946 = vperm.xlu0 %1945, %v1841
        %v1947 = vpop.permute.xlu0 %1946
        %1948 = vset.pattern.permute.xlu0 0
        %1949 = vperm.xlu0 %1948, %v1842
        %v1950 = vpop.permute.xlu0 %1949
        %1951 = vset.pattern.permute.xlu0 0
        %1952 = vperm.xlu0 %1951, %v1843
        %v1953 = vpop.permute.xlu0 %1952
        %1954 = vset.pattern.permute.xlu0 0
        %1955 = vperm.xlu0 %1954, %v1844
        %v1956 = vpop.permute.xlu0 %1955
        %1957 = vset.pattern.permute.xlu0 0
        %1958 = vperm.xlu0 %1957, %v1845
        %v1959 = vpop.permute.xlu0 %1958
        %1960 = vset.pattern.permute.xlu0 0
        %1961 = vperm.xlu0 %1960, %v1846
        %v1962 = vpop.permute.xlu0 %1961
        %1963 = vset.pattern.permute.xlu0 0
        %1964 = vperm.xlu0 %1963, %v1847
        %v1965 = vpop.permute.xlu0 %1964
        %1966 = vset.pattern.permute.xlu0 0
        %1967 = vperm.xlu0 %1966, %v1848
        %v1968 = vpop.permute.xlu0 %1967
        %1969 = vset.pattern.permute.xlu0 0
        %1970 = vperm.xlu0 %1969, %v1849
        %v1971 = vpop.permute.xlu0 %1970
        %1972 = vset.pattern.permute.xlu0 0
        %1973 = vperm.xlu0 %1972, %v1850
        %v1974 = vpop.permute.xlu0 %1973
        %1975 = vset.pattern.permute.xlu0 0
        %1976 = vperm.xlu0 %1975, %v1851
        %v1977 = vpop.permute.xlu0 %1976
        %1978 = vset.pattern.permute.xlu0 0
        %1979 = vperm.xlu0 %1978, %v1852
        %v1980 = vpop.permute.xlu0 %1979
        %1981 = vset.pattern.permute.xlu0 0
        %1982 = vperm.xlu0 %1981, %v1853
        %v1983 = vpop.permute.xlu0 %1982
        %1984 = vset.pattern.permute.xlu0 0
        %1985 = vperm.xlu0 %1984, %v1854
        %v1986 = vpop.permute.xlu0 %1985
        %1987 = vset.pattern.permute.xlu0 0
        %1988 = vperm.xlu0 %1987, %v1855
        %v1989 = vpop.permute.xlu0 %1988
        %1990 = vset.pattern.permute.xlu0 0
        %1991 = vperm.xlu0 %1990, %v1856
        %v1992 = vpop.permute.xlu0 %1991
        %1993 = vset.pattern.permute.xlu0 0
        %1994 = vperm.xlu0 %1993, %v1857
        %v1995 = vpop.permute.xlu0 %1994
        %1996 = vset.pattern.permute.xlu0 0
        %1997 = vperm.xlu0 %1996, %v1858
        %v1998 = vpop.permute.xlu0 %1997
        %1999 = vset.pattern.permute.xlu0 0
        %2000 = vperm.xlu0 %1999, %v1859
        %v2001 = vpop.permute.xlu0 %2000
        %2002 = vset.pattern.permute.xlu0 0
        %2003 = vperm.xlu0 %2002, %v1860
        %v2004 = vpop.permute.xlu0 %2003
        %2005 = vset.pattern.permute.xlu0 0
        %2006 = vperm.xlu0 %2005, %v1861
        %v2007 = vpop.permute.xlu0 %2006
        %2008 = vset.pattern.permute.xlu0 0
        %2009 = vperm.xlu0 %2008, %v1862
        %v2010 = vpop.permute.xlu0 %2009
        %2011 = vset.pattern.permute.xlu0 0
        %2012 = vperm.xlu0 %2011, %v1863
        %v2013 = vpop.permute.xlu0 %2012
        %2014 = vset.pattern.permute.xlu0 0
        %2015 = vperm.xlu0 %2014, %v1864
        %v2016 = vpop.permute.xlu0 %2015
        %2017 = vset.pattern.permute.xlu0 0
        %2018 = vperm.xlu0 %2017, %v1865
        %v2019 = vpop.permute.xlu0 %2018
        %2020 = vset.pattern.permute.xlu0 0
        %2021 = vperm.xlu0 %2020, %v1866
        %v2022 = vpop.permute.xlu0 %2021
        %2023 = vset.pattern.permute.xlu0 0
        %2024 = vperm.xlu0 %2023, %v1867
        %v2025 = vpop.permute.xlu0 %2024
        %2026 = vset.pattern.permute.xlu0 0
        %2027 = vperm.xlu0 %2026, %v1868
        %v2028 = vpop.permute.xlu0 %2027
        %2029 = vset.pattern.permute.xlu0 0
        %2030 = vperm.xlu0 %2029, %v1869
        %v2031 = vpop.permute.xlu0 %2030
        %2032 = vset.pattern.permute.xlu0 0
        %2033 = vperm.xlu0 %2032, %v1870
        %v2034 = vpop.permute.xlu0 %2033
        %2035 = vset.pattern.permute.xlu0 0
        %2036 = vperm.xlu0 %2035, %v1871
        %v2037 = vpop.permute.xlu0 %2036
        %2038 = vset.pattern.permute.xlu0 0
        %2039 = vperm.xlu0 %2038, %v1872
        %v2040 = vpop.permute.xlu0 %2039
        %2041 = vset.pattern.permute.xlu0 0
        %2042 = vperm.xlu0 %2041, %v1873
        %v2043 = vpop.permute.xlu0 %2042
        %2044 = vset.pattern.permute.xlu0 0
        %2045 = vperm.xlu0 %2044, %v1874
        %v2046 = vpop.permute.xlu0 %2045
        %2047 = vset.pattern.permute.xlu0 0
        %2048 = vperm.xlu0 %2047, %v1875
        %v2049 = vpop.permute.xlu0 %2048
        %2050 = vset.pattern.permute.xlu0 0
        %2051 = vperm.xlu0 %2050, %v1876
        %v2052 = vpop.permute.xlu0 %2051
        %2053 = vset.pattern.permute.xlu0 0
        %2054 = vperm.xlu0 %2053, %v1877
        %v2055 = vpop.permute.xlu0 %2054
        %2056 = vset.pattern.permute.xlu0 0
        %2057 = vperm.xlu0 %2056, %v1878
        %v2058 = vpop.permute.xlu0 %2057
        %2059 = vset.pattern.permute.xlu0 0
        %2060 = vperm.xlu0 %2059, %v1879
        %v2061 = vpop.permute.xlu0 %2060
        %2062 = vset.pattern.permute.xlu0 0
        %2063 = vperm.xlu0 %2062, %v1880
        %v2064 = vpop.permute.xlu0 %2063
        %2065 = vset.pattern.permute.xlu0 0
        %2066 = vperm.xlu0 %2065, %v1881
        %v2067 = vpop.permute.xlu0 %2066
        %2068 = vset.pattern.permute.xlu0 0
        %2069 = vperm.xlu0 %2068, %v1882
        %v2070 = vpop.permute.xlu0 %2069
        %2071 = vset.pattern.permute.xlu0 0
        %2072 = vperm.xlu0 %2071, %v1883
        %v2073 = vpop.permute.xlu0 %2072
        %2074 = vset.pattern.permute.xlu0 0
        %2075 = vperm.xlu0 %2074, %v1884
        %v2076 = vpop.permute.xlu0 %2075
        %vm2077 = vcmp.eq.s32.totalorder %v1887, 1
        %vm2078 = vcmp.eq.s32.totalorder %v1890, 1
        %vm2079 = vcmp.eq.s32.totalorder %v1893, 1
        %vm2080 = vcmp.eq.s32.totalorder %v1896, 1
        %vm2081 = vcmp.eq.s32.totalorder %v1899, 1
        %vm2082 = vcmp.eq.s32.totalorder %v1902, 1
        %vm2083 = vcmp.eq.s32.totalorder %v1905, 1
        %vm2084 = vcmp.eq.s32.totalorder %v1908, 1
        %vm2085 = vcmp.eq.s32.totalorder %v1911, 1
        %vm2086 = vcmp.eq.s32.totalorder %v1914, 1
        %vm2087 = vcmp.eq.s32.totalorder %v1917, 1
        %vm2088 = vcmp.eq.s32.totalorder %v1920, 1
        %vm2089 = vcmp.eq.s32.totalorder %v1923, 1
        %vm2090 = vcmp.eq.s32.totalorder %v1926, 1
        %vm2091 = vcmp.eq.s32.totalorder %v1929, 1
        %vm2092 = vcmp.eq.s32.totalorder %v1932, 1
        %vm2093 = vcmp.eq.s32.totalorder %v1935, 1
        %vm2094 = vcmp.eq.s32.totalorder %v1938, 1
        %vm2095 = vcmp.eq.s32.totalorder %v1941, 1
        %vm2096 = vcmp.eq.s32.totalorder %v1944, 1
        %vm2097 = vcmp.eq.s32.totalorder %v1947, 1
        %vm2098 = vcmp.eq.s32.totalorder %v1950, 1
        %vm2099 = vcmp.eq.s32.totalorder %v1953, 1
        %vm2100 = vcmp.eq.s32.totalorder %v1956, 1
        %vm2101 = vcmp.eq.s32.totalorder %v1959, 1
        %vm2102 = vcmp.eq.s32.totalorder %v1962, 1
        %vm2103 = vcmp.eq.s32.totalorder %v1965, 1
        %vm2104 = vcmp.eq.s32.totalorder %v1968, 1
        %vm2105 = vcmp.eq.s32.totalorder %v1971, 1
        %vm2106 = vcmp.eq.s32.totalorder %v1974, 1
        %vm2107 = vcmp.eq.s32.totalorder %v1977, 1
        %vm2108 = vcmp.eq.s32.totalorder %v1980, 1
        %vm2109 = vcmp.eq.s32.totalorder %v1983, 1
        %vm2110 = vcmp.eq.s32.totalorder %v1986, 1
        %vm2111 = vcmp.eq.s32.totalorder %v1989, 1
        %vm2112 = vcmp.eq.s32.totalorder %v1992, 1
        %vm2113 = vcmp.eq.s32.totalorder %v1995, 1
        %vm2114 = vcmp.eq.s32.totalorder %v1998, 1
        %vm2115 = vcmp.eq.s32.totalorder %v2001, 1
        %vm2116 = vcmp.eq.s32.totalorder %v2004, 1
        %vm2117 = vcmp.eq.s32.totalorder %v2007, 1
        %vm2118 = vcmp.eq.s32.totalorder %v2010, 1
        %vm2119 = vcmp.eq.s32.totalorder %v2013, 1
        %vm2120 = vcmp.eq.s32.totalorder %v2016, 1
        %vm2121 = vcmp.eq.s32.totalorder %v2019, 1
        %vm2122 = vcmp.eq.s32.totalorder %v2022, 1
        %vm2123 = vcmp.eq.s32.totalorder %v2025, 1
        %vm2124 = vcmp.eq.s32.totalorder %v2028, 1
        %vm2125 = vcmp.eq.s32.totalorder %v2031, 1
        %vm2126 = vcmp.eq.s32.totalorder %v2034, 1
        %vm2127 = vcmp.eq.s32.totalorder %v2037, 1
        %vm2128 = vcmp.eq.s32.totalorder %v2040, 1
        %vm2129 = vcmp.eq.s32.totalorder %v2043, 1
        %vm2130 = vcmp.eq.s32.totalorder %v2046, 1
        %vm2131 = vcmp.eq.s32.totalorder %v2049, 1
        %vm2132 = vcmp.eq.s32.totalorder %v2052, 1
        %vm2133 = vcmp.eq.s32.totalorder %v2055, 1
        %vm2134 = vcmp.eq.s32.totalorder %v2058, 1
        %vm2135 = vcmp.eq.s32.totalorder %v2061, 1
        %vm2136 = vcmp.eq.s32.totalorder %v2064, 1
        %vm2137 = vcmp.eq.s32.totalorder %v2067, 1
        %vm2138 = vcmp.eq.s32.totalorder %v2070, 1
        %vm2139 = vcmp.eq.s32.totalorder %v2073, 1
        %vm2140 = vcmp.eq.s32.totalorder %v2076, 1
        %v2141 = vsel %vm2077, %v200, -inf
        %v2142 = vsel %vm2078, %v201, -inf
        %v2143 = vsel %vm2079, %v202, -inf
        %v2144 = vsel %vm2080, %v203, -inf
        %v2145 = vsel %vm2081, %v204, -inf
        %v2146 = vsel %vm2082, %v205, -inf
        %v2147 = vsel %vm2083, %v206, -inf
        %v2148 = vsel %vm2084, %v207, -inf
        %v2149 = vsel %vm2085, %v208, -inf
        %v2150 = vsel %vm2086, %v209, -inf
        %v2151 = vsel %vm2087, %v210, -inf
        %v2152 = vsel %vm2088, %v211, -inf
        %v2153 = vsel %vm2089, %v212, -inf
        %v2154 = vsel %vm2090, %v213, -inf
        %v2155 = vsel %vm2091, %v214, -inf
        %v2156 = vsel %vm2092, %v215, -inf
        %v2157 = vsel %vm2093, %v216, -inf
        %v2158 = vsel %vm2094, %v217, -inf
        %v2159 = vsel %vm2095, %v218, -inf
        %v2160 = vsel %vm2096, %v219, -inf
        %v2161 = vsel %vm2097, %v220, -inf
        %v2162 = vsel %vm2098, %v221, -inf
        %v2163 = vsel %vm2099, %v222, -inf
        %v2164 = vsel %vm2100, %v223, -inf
        %v2165 = vsel %vm2101, %v224, -inf
        %v2166 = vsel %vm2102, %v225, -inf
        %v2167 = vsel %vm2103, %v226, -inf
        %v2168 = vsel %vm2104, %v227, -inf
        %v2169 = vsel %vm2105, %v228, -inf
        %v2170 = vsel %vm2106, %v229, -inf
        %v2171 = vsel %vm2107, %v230, -inf
        %v2172 = vsel %vm2108, %v231, -inf
        %v2173 = vsel %vm2109, %v232, -inf
        %v2174 = vsel %vm2110, %v233, -inf
        %v2175 = vsel %vm2111, %v234, -inf
        %v2176 = vsel %vm2112, %v235, -inf
        %v2177 = vsel %vm2113, %v236, -inf
        %v2178 = vsel %vm2114, %v237, -inf
        %v2179 = vsel %vm2115, %v238, -inf
        %v2180 = vsel %vm2116, %v239, -inf
        %v2181 = vsel %vm2117, %v240, -inf
        %v2182 = vsel %vm2118, %v241, -inf
        %v2183 = vsel %vm2119, %v242, -inf
        %v2184 = vsel %vm2120, %v243, -inf
        %v2185 = vsel %vm2121, %v244, -inf
        %v2186 = vsel %vm2122, %v245, -inf
        %v2187 = vsel %vm2123, %v246, -inf
        %v2188 = vsel %vm2124, %v247, -inf
        %v2189 = vsel %vm2125, %v248, -inf
        %v2190 = vsel %vm2126, %v249, -inf
        %v2191 = vsel %vm2127, %v250, -inf
        %v2192 = vsel %vm2128, %v251, -inf
        %v2193 = vsel %vm2129, %v252, -inf
        %v2194 = vsel %vm2130, %v253, -inf
        %v2195 = vsel %vm2131, %v254, -inf
        %v2196 = vsel %vm2132, %v255, -inf
        %v2197 = vsel %vm2133, %v256, -inf
        %v2198 = vsel %vm2134, %v257, -inf
        %v2199 = vsel %vm2135, %v258, -inf
        %v2200 = vsel %vm2136, %v259, -inf
        %v2201 = vsel %vm2137, %v260, -inf
        %v2202 = vsel %vm2138, %v261, -inf
        %v2203 = vsel %vm2139, %v262, -inf
        %v2204 = vsel %vm2140, %v263, -inf
        %v2205 = vsel %vm1035, %v2141, -inf
        %v2206 = vsel %vm1035, %v2142, -inf
        %v2207 = vsel %vm1035, %v2143, -inf
        %v2208 = vsel %vm1035, %v2144, -inf
        %v2209 = vsel %vm1035, %v2145, -inf
        %v2210 = vmax.f32 %v2205, %v2209
        %v2211 = vsel %vm1035, %v2146, -inf
        %v2212 = vmax.f32 %v2206, %v2211
        %v2213 = vsel %vm1035, %v2147, -inf
        %v2214 = vmax.f32 %v2207, %v2213
        %v2215 = vsel %vm1035, %v2148, -inf
        %v2216 = vmax.f32 %v2208, %v2215
        %v2217 = vsel %vm1035, %v2149, -inf
        %v2218 = vmax.f32 %v2210, %v2217
        %v2219 = vsel %vm1035, %v2150, -inf
        %v2220 = vmax.f32 %v2212, %v2219
        %v2221 = vsel %vm1035, %v2151, -inf
        %v2222 = vmax.f32 %v2214, %v2221
        %v2223 = vsel %vm1035, %v2152, -inf
        %v2224 = vmax.f32 %v2216, %v2223
        %v2225 = vsel %vm1035, %v2153, -inf
        %v2226 = vmax.f32 %v2218, %v2225
        %v2227 = vsel %vm1035, %v2154, -inf
        %v2228 = vmax.f32 %v2220, %v2227
        %v2229 = vsel %vm1035, %v2155, -inf
        %v2230 = vmax.f32 %v2222, %v2229
        %v2231 = vsel %vm1035, %v2156, -inf
        %v2232 = vmax.f32 %v2224, %v2231
        %v2233 = vsel %vm1035, %v2157, -inf
        %v2234 = vmax.f32 %v2226, %v2233
        %v2235 = vsel %vm1035, %v2158, -inf
        %v2236 = vmax.f32 %v2228, %v2235
        %v2237 = vsel %vm1035, %v2159, -inf
        %v2238 = vmax.f32 %v2230, %v2237
        %v2239 = vsel %vm1035, %v2160, -inf
        %v2240 = vmax.f32 %v2232, %v2239
        %v2241 = vsel %vm1035, %v2161, -inf
        %v2242 = vmax.f32 %v2234, %v2241
        %v2243 = vsel %vm1035, %v2162, -inf
        %v2244 = vmax.f32 %v2236, %v2243
        %v2245 = vsel %vm1035, %v2163, -inf
        %v2246 = vmax.f32 %v2238, %v2245
        %v2247 = vsel %vm1035, %v2164, -inf
        %v2248 = vmax.f32 %v2240, %v2247
        %v2249 = vsel %vm1035, %v2165, -inf
        %v2250 = vmax.f32 %v2242, %v2249
        %v2251 = vsel %vm1035, %v2166, -inf
        %v2252 = vmax.f32 %v2244, %v2251
        %v2253 = vsel %vm1035, %v2167, -inf
        %v2254 = vmax.f32 %v2246, %v2253
        %v2255 = vsel %vm1035, %v2168, -inf
        %v2256 = vmax.f32 %v2248, %v2255
        %v2257 = vsel %vm1035, %v2169, -inf
        %v2258 = vmax.f32 %v2250, %v2257
        %v2259 = vsel %vm1035, %v2170, -inf
        %v2260 = vmax.f32 %v2252, %v2259
        %v2261 = vsel %vm1035, %v2171, -inf
        %v2262 = vmax.f32 %v2254, %v2261
        %v2263 = vsel %vm1035, %v2172, -inf
        %v2264 = vmax.f32 %v2256, %v2263
        %v2265 = vsel %vm1035, %v2173, -inf
        %v2266 = vmax.f32 %v2258, %v2265
        %v2267 = vsel %vm1035, %v2174, -inf
        %v2268 = vmax.f32 %v2260, %v2267
        %v2269 = vsel %vm1035, %v2175, -inf
        %v2270 = vmax.f32 %v2262, %v2269
        %v2271 = vsel %vm1035, %v2176, -inf
        %v2272 = vmax.f32 %v2264, %v2271
        %v2273 = vsel %vm1035, %v2177, -inf
        %v2274 = vmax.f32 %v2266, %v2273
        %v2275 = vsel %vm1035, %v2178, -inf
        %v2276 = vmax.f32 %v2268, %v2275
        %v2277 = vsel %vm1035, %v2179, -inf
        %v2278 = vmax.f32 %v2270, %v2277
        %v2279 = vsel %vm1035, %v2180, -inf
        %v2280 = vmax.f32 %v2272, %v2279
        %v2281 = vsel %vm1035, %v2181, -inf
        %v2282 = vmax.f32 %v2274, %v2281
        %v2283 = vsel %vm1035, %v2182, -inf
        %v2284 = vmax.f32 %v2276, %v2283
        %v2285 = vsel %vm1035, %v2183, -inf
        %v2286 = vmax.f32 %v2278, %v2285
        %v2287 = vsel %vm1035, %v2184, -inf
        %v2288 = vmax.f32 %v2280, %v2287
        %v2289 = vsel %vm1035, %v2185, -inf
        %v2290 = vmax.f32 %v2282, %v2289
        %v2291 = vsel %vm1035, %v2186, -inf
        %v2292 = vmax.f32 %v2284, %v2291
        %v2293 = vsel %vm1035, %v2187, -inf
        %v2294 = vmax.f32 %v2286, %v2293
        %v2295 = vsel %vm1035, %v2188, -inf
        %v2296 = vmax.f32 %v2288, %v2295
        %v2297 = vsel %vm1035, %v2189, -inf
        %v2298 = vmax.f32 %v2290, %v2297
        %v2299 = vsel %vm1035, %v2190, -inf
        %v2300 = vmax.f32 %v2292, %v2299
        %v2301 = vsel %vm1035, %v2191, -inf
        %v2302 = vmax.f32 %v2294, %v2301
        %v2303 = vsel %vm1035, %v2192, -inf
        %v2304 = vmax.f32 %v2296, %v2303
        %v2305 = vsel %vm1035, %v2193, -inf
        %v2306 = vmax.f32 %v2298, %v2305
        %v2307 = vsel %vm1035, %v2194, -inf
        %v2308 = vmax.f32 %v2300, %v2307
        %v2309 = vsel %vm1035, %v2195, -inf
        %v2310 = vmax.f32 %v2302, %v2309
        %v2311 = vsel %vm1035, %v2196, -inf
        %v2312 = vmax.f32 %v2304, %v2311
        %v2313 = vsel %vm1035, %v2197, -inf
        %v2314 = vmax.f32 %v2306, %v2313
        %v2315 = vsel %vm1035, %v2198, -inf
        %v2316 = vmax.f32 %v2308, %v2315
        %v2317 = vsel %vm1035, %v2199, -inf
        %v2318 = vmax.f32 %v2310, %v2317
        %v2319 = vsel %vm1035, %v2200, -inf
        %v2320 = vmax.f32 %v2312, %v2319
        %v2321 = vsel %vm1035, %v2201, -inf
        %v2322 = vmax.f32 %v2314, %v2321
        %v2323 = vsel %vm1035, %v2202, -inf
        %v2324 = vmax.f32 %v2316, %v2323
        %v2325 = vsel %vm1035, %v2203, -inf
        %v2326 = vmax.f32 %v2318, %v2325
        %v2327 = vsel %vm1035, %v2204, -inf
        %v2328 = vmax.f32 %v2320, %v2327
        %v2329 = vmax.f32 %v2322, %v2324
        %v2330 = vmax.f32 %v2326, %v2328
        %v2331 = vmax.f32 %v2329, %v2330
        %v2332 = vrot.slane %v2331, 4
        %v2333 = vmax.f32 %v2331, %v2332
        %v2334 = vrot.slane %v2333, 2
        %v2335 = vmax.f32 %v2333, %v2334
        %v2336 = vrot.slane %v2335, 1
        %v2337 = vmax.f32 %v2335, %v2336
        %v2338 = vld [vmem:[#allocation2 + $0x2] sm:$0x1]
        %v2339 = vmax.f32 %v2338, %v2337
        %2340 = vst.msk [vmem:[#allocation2 + $0x2] sm:$0x1] %vm1171, %v2339
        // Predicated region
        $region33: #{tpu_custom_call.1} parent=27 // pred_check
          %p2341 = pneg %p79
        $region34: #{tpu_custom_call.1} parent=27 // pred_check_branch
          %2343 = sbr.rel (%p2341) target = $region36
        $region35: #{tpu_custom_call.1} parent=27 // pred_region
          %s2345 = ssub.s32 64, 64
          %2346 = vsyncadd [#allocation3], %s2345
          %s2348 = sshll.u32 [#allocation2], 4
          %s2349 = int_to_ptr.vmem [resolvable:$true] %s2348
          %2351 = dma.vmem_to_hbm [thread:$0]  %s2349, 64, %s2, [#allocation3]
        $region36: #{tpu_custom_call.1} parent=27 // pred_fallthru
          _
        // Predicated region
        $region37: #{tpu_custom_call.1} parent=27 // pred_check
          %p2352 = pneg %p79
        $region38: #{tpu_custom_call.1} parent=27 // pred_check_branch
          %2354 = sbr.rel (%p2352) target = $region40
        $region39: #{tpu_custom_call.1} parent=27 // pred_region
          %2355 = dma.done [#allocation3], 64
        $region40: #{tpu_custom_call.1} parent=27 // pred_fallthru
          _
      $region28: #{tpu_custom_call.1} parent=5 // pred_fallthru
        _
      %p2356 = scmp.le.s32.totalorder 2, %s9
      // Predicated region
      $region41: #{tpu_custom_call.1} parent=5 // pred_check
        %p2357 = pneg %p2356
      $region42: #{tpu_custom_call.1} parent=5 // pred_check_branch
        %2359 = sbr.rel (%p2357) target = $region44
      $region43: #{tpu_custom_call.1} parent=5 // pred_region
        %s2360 = ssub.s32 %s9, 2
      $region44: #{tpu_custom_call.1} parent=5 // pred_fallthru
        _
    $region6: #{tpu_custom_call.1} parent=1 // loop_footer
      %s13 = sadd.s32 1, %s9
    $region7: #{tpu_custom_call.1} parent=1 // loop_footer_branch
      %8 = sbr.rel target = $region3
    $region8: #{tpu_custom_call.1} parent=1 // loop_exit
      _
    %2361 = vsyncpa [#allocation3], 1
    %s2362 = scalar_lea.sflag [#allocation3], 1
    %2363 = vsyncpa %s2362, 1

</llo_original>
